<compile_context>
chip_gen: v7x
topology: tpu7x:2x2x1
jax: 0.10.0
libtpu: 0.0.40
codegen_flags: <defaults>
</compile_context>

<pallas_src>
import jax
import jax.numpy as jnp
from jax.experimental import pallas as pl
from jax.experimental.pallas import tpu as pltpu

EPS = 1e-12
NEG_SLOPE = 0.2


# ---------------------------------------------------------------------------
# In-kernel building blocks (all exact f32 elementwise arithmetic)
# ---------------------------------------------------------------------------
def _vn_linear_planes(planes, w):
    """VNLinear on per-component planes: out_j = W @ planes_j.

    planes: tuple of 3 arrays (Cin, TN); w: (Cout, Cin) f32 value.
    Returns list of 3 arrays (Cout, TN).
    (For the small channel counts of this module the exact-f32 VPU FMA path is
    preferred over an under-filled MXU matmul.)"""
    cout, cin = w.shape
    tn = planes[0].shape[-1]
    outs = []
    for j in range(3):
        acc = None
        for i in range(cin):
            xib = jnp.broadcast_to(planes[j][i:i + 1, :], (cout, tn))
            term = xib * w[:, i:i + 1]
            acc = term if acc is None else acc + term
        outs.append(acc)
    return outs


def _vn_linear_leaky_relu_planes(planes, wf, wd):
    """VNLinearLeakyReLU (no batchnorm, negative_slope=0.2) on component planes.

    Fuses the map_to_feat and map_to_dir contractions so each x row is read
    (and sublane-broadcast) exactly once."""
    cout, cin = wf.shape
    tn = planes[0].shape[-1]
    p, d = [], []
    for j in range(3):
        pj = None
        dj = None
        for i in range(cin):
            xib = jnp.broadcast_to(planes[j][i:i + 1, :], (cout, tn))
            tp = xib * wf[:, i:i + 1]
            td = xib * wd[:, i:i + 1]
            pj = tp if pj is None else pj + tp
            dj = td if dj is None else dj + td
        p.append(pj)
        d.append(dj)

    dotprod = p[0] * d[0] + p[1] * d[1] + p[2] * d[2]      # (Cout, TN)
    d_norm_sq = d[0] * d[0] + d[1] * d[1] + d[2] * d[2]    # (Cout, TN)
    mask = (dotprod >= 0.0).astype(jnp.float32)
    # mask*p + (1-mask)*(p - q*d) == p - (1-mask)*q*d   (mask is exactly 0/1),
    # so this matches the module bit-for-bit in f32.
    coef = (1.0 - mask) * (dotprod / (d_norm_sq + EPS))
    return [NEG_SLOPE * p[j] + (1.0 - NEG_SLOPE) * (p[j] - coef * d[j])
            for j in range(3)]


def _rotmat_kernel(x_ref, w1f_ref, w1d_ref, w2f_ref, w2d_ref, wlin_ref,
                   xstd_ref, rot_ref):
    # Per-component (C, TN) planes: channels on sublanes, points on lanes.
    x = (x_ref[0, 0, :, :], x_ref[0, 1, :, :], x_ref[0, 2, :, :])
    C, TN = x[0].shape

    z = _vn_linear_leaky_relu_planes(x, w1f_ref[...], w1d_ref[...])   # C//2
    z = _vn_linear_leaky_relu_planes(z, w2f_ref[...], w2d_ref[...])   # C//4
    z = _vn_linear_planes(z, wlin_ref[...])                           # 2

    # Gram-Schmidt per point on (1, TN) rows.
    v1 = [z[j][0:1, :] for j in range(3)]
    v2 = [z[j][1:2, :] for j in range(3)]

    n1 = jnp.sqrt(v1[0] * v1[0] + v1[1] * v1[1] + v1[2] * v1[2])
    inv1 = 1.0 / (n1 + EPS)
    u1 = [v1[j] * inv1 for j in range(3)]

    proj = v2[0] * u1[0] + v2[1] * u1[1] + v2[2] * u1[2]
    w2v = [v2[j] - proj * u1[j] for j in range(3)]
    n2 = jnp.sqrt(w2v[0] * w2v[0] + w2v[1] * w2v[1] + w2v[2] * w2v[2])
    inv2 = 1.0 / (n2 + EPS)
    u2 = [w2v[j] * inv2 for j in range(3)]

    u3 = [u1[1] * u2[2] - u1[2] * u2[1],
          u1[2] * u2[0] - u1[0] * u2[2],
          u1[0] * u2[1] - u1[1] * u2[0]]

    cols = (u1, u2, u3)                        # rot[j, k, n] = cols[k][j][n]
    for j in range(3):
        for k in range(3):
            rot_ref[0, j, k:k + 1, :] = cols[k][j]

    # x_std[i, k, n] = sum_j x[i, j, n] * rot[j, k, n]  (stored as (k, i, n))
    for k in range(3):
        uk = cols[k]
        xstd_ref[0, k, :, :] = (
            x[0] * jnp.broadcast_to(uk[0], (C, TN))
            + x[1] * jnp.broadcast_to(uk[1], (C, TN))
            + x[2] * jnp.broadcast_to(uk[2], (C, TN)))


# ---------------------------------------------------------------------------
# Wrapper
# ---------------------------------------------------------------------------
def _pick_tile(npad, c):
    """Largest lane-dense point tile whose (double-buffered) footprint is small."""
    budget = 8 * 1024 * 1024  # conservative VMEM budget in bytes
    for cand in (2048, 1024, 512, 256, 128):
        if npad % cand != 0:
            continue
        # x + x_std (double-buffered) + rot (double-buffered) + live intermediates
        approx_bytes = (2 * (6 * c + 9) + 6 * c) * cand * 4
        if approx_bytes <= budget or cand == 128:
            return cand
    return 128


def vn_rotation_matrix(x, w1f, w1d, w2f, w2d, wlin):
    """x: (B, C, 3, N) f32. Returns (x_std (B,C,3,N), rot (B,3,3,N))."""
    B, C, three, N = x.shape
    assert three == 3

    npad = ((N + 127) // 128) * 128            # lane-dense point tiles
    tn = _pick_tile(npad, C)
    ntiles = npad // tn

    xt = jnp.transpose(x, (0, 2, 1, 3))        # (B, 3, C, N): layout plumbing
    if npad != N:
        xt = jnp.pad(xt, ((0, 0), (0, 0), (0, 0), (0, npad - N)))

    def wspec(w):
        return pl.BlockSpec(w.shape, lambda b, n: (0, 0))

    xstd_t, rot = pl.pallas_call(
        _rotmat_kernel,
        out_shape=(jax.ShapeDtypeStruct((B, 3, C, npad), x.dtype),
                   jax.ShapeDtypeStruct((B, 3, 3, npad), x.dtype)),
        grid=(B, ntiles),
        in_specs=[pl.BlockSpec((1, 3, C, tn), lambda b, n: (b, 0, 0, n)),
                  wspec(w1f), wspec(w1d), wspec(w2f), wspec(w2d), wspec(wlin)],
        out_specs=(pl.BlockSpec((1, 3, C, tn), lambda b, n: (b, 0, 0, n)),
                   pl.BlockSpec((1, 3, 3, tn), lambda b, n: (b, 0, 0, n))),
        compiler_params=pltpu.CompilerParams(
            dimension_semantics=("parallel", "parallel")),
    )(xt, w1f, w1d, w2f, w2d, wlin)

    x_std = jnp.transpose(xstd_t, (0, 2, 1, 3))[..., :N]
    rot = rot[..., :N]
    return x_std, rot


# ---------------------------------------------------------------------------
# Deterministic parameter init (nn.Linear default: U(-1/sqrt(fan_in), +))
# ---------------------------------------------------------------------------
def init_params(key, in_channels):
    c = in_channels
    shapes = [(c // 2, c), (c // 2, c),            # vn1 map_to_feat / map_to_dir
              (c // 4, c // 2), (c // 4, c // 2),  # vn2 map_to_feat / map_to_dir
              (2, c // 4)]                         # vn_lin
    keys = jax.random.split(key, len(shapes))
    params = []
    for k, (o, i) in zip(keys, shapes):
        bound = float(i) ** -0.5
        params.append(jax.random.uniform(k, (o, i), jnp.float32, -bound, bound))
    return params


# ---------------------------------------------------------------------------
# Pure-JAX reference (exact elementwise f32; mirrors the PyTorch module).
# NOTE: no einsum/dot here — on TPU those default to reduced (bf16) matmul
# precision, which would corrupt the comparison.
# ---------------------------------------------------------------------------
def reference_forward(x, w1f, w1d, w2f, w2d, wlin):
    def vnlin(x, w):   # out[b,o,v,n] = sum_i w[o,i] * x[b,i,v,n]
        return jnp.sum(w[None, :, :, None, None] * x[:, None, :, :, :], axis=2)

    def vnleaky(x, wf, wd):
        p = vnlin(x, wf)
        d = vnlin(x, wd)
        dot = jnp.sum(p * d, axis=2, keepdims=True)
        mask = (dot >= 0).astype(x.dtype)
        dns = jnp.sum(d * d, axis=2, keepdims=True)
        return NEG_SLOPE * p + (1.0 - NEG_SLOPE) * (
            mask * p + (1.0 - mask) * (p - dot / (dns + EPS) * d))

    z = vnleaky(x, w1f, w1d)
    z = vnleaky(z, w2f, w2d)
    z = vnlin(z, wlin)                                       # (B, 2, 3, N)
    v1 = z[:, 0]
    u1 = v1 / (jnp.sqrt(jnp.sum(v1 * v1, axis=1, keepdims=True)) + EPS)
    v2 = z[:, 1]
    v2 = v2 - jnp.sum(v2 * u1, axis=1, keepdims=True) * u1
    u2 = v2 / (jnp.sqrt(jnp.sum(v2 * v2, axis=1, keepdims=True)) + EPS)
    u3 = jnp.cross(u1, u2, axis=1)
    rot = jnp.transpose(jnp.stack([u1, u2, u3], axis=1), (0, 2, 1, 3))
    # x_std[b,i,k,n] = sum_j x[b,i,j,n] * rot[b,j,k,n]
    x_std = jnp.sum(x[:, :, :, None, :] * rot[:, None, :, :, :], axis=2)
    return x_std, rot


if __name__ == "__main__":
    key = jax.random.PRNGKey(0)
    kx, kw = jax.random.split(key)
    B, C, N = 2, 8, 16                  # in_channels=8, 16 points, dim=4 layout
    x = jax.random.normal(kx, (B, C, 3, N), jnp.float32)
    w1f, w1d, w2f, w2d, wlin = init_params(kw, C)

    x_std, rot = vn_rotation_matrix(x, w1f, w1d, w2f, w2d, wlin)
    jax.block_until_ready((x_std, rot))

    x_std_ref, rot_ref = reference_forward(x, w1f, w1d, w2f, w2d, wlin)
    assert x_std.shape == (B, C, 3, N) and rot.shape == (B, 3, 3, N)
    assert jnp.allclose(x_std, x_std_ref, atol=1e-4, rtol=1e-4), \
        float(jnp.max(jnp.abs(x_std - x_std_ref)))
    assert jnp.allclose(rot, rot_ref, atol=1e-4, rtol=1e-4), \
        float(jnp.max(jnp.abs(rot - rot_ref)))
    print("KERNEL_OK")
</pallas_src>

<mosaic_0001>
module attributes {stable_mosaic.version = 11 : i64} {
  func.func @_rotmat_kernel(%arg0: i32, %arg1: i32, %arg2: memref<1x3x8x128xf32, #tpu.memory_space<vmem>>, %arg3: memref<4x8xf32, #tpu.memory_space<vmem>>, %arg4: memref<4x8xf32, #tpu.memory_space<vmem>>, %arg5: memref<2x4xf32, #tpu.memory_space<vmem>>, %arg6: memref<2x4xf32, #tpu.memory_space<vmem>>, %arg7: memref<2x2xf32, #tpu.memory_space<vmem>>, %arg8: memref<1x3x8x128xf32, #tpu.memory_space<vmem>>, %arg9: memref<1x3x3x128xf32, #tpu.memory_space<vmem>>) attributes {dimension_semantics = [#tpu.dimension_semantics<parallel>, #tpu.dimension_semantics<parallel>], iteration_bounds = array<i64: 2, 1>, scalar_prefetch = 0 : i64, scratch_operands = 0 : i64, tpu.core_type = #tpu.core_type<tc>, window_params = [{transform_indices = @transform_0, window_bounds = array<i64: 1, 3, 8, 128>}, {pipeline_mode = #tpu.pipeline_mode<synchronous>, transform_indices = @transform_1, window_bounds = array<i64: 4, 8>}, {pipeline_mode = #tpu.pipeline_mode<synchronous>, transform_indices = @transform_2, window_bounds = array<i64: 4, 8>}, {pipeline_mode = #tpu.pipeline_mode<synchronous>, transform_indices = @transform_3, window_bounds = array<i64: 2, 4>}, {pipeline_mode = #tpu.pipeline_mode<synchronous>, transform_indices = @transform_4, window_bounds = array<i64: 2, 4>}, {pipeline_mode = #tpu.pipeline_mode<synchronous>, transform_indices = @transform_5, window_bounds = array<i64: 2, 2>}, {transform_indices = @transform_6, window_bounds = array<i64: 1, 3, 8, 128>}, {transform_indices = @transform_7, window_bounds = array<i64: 1, 3, 3, 128>}]} {
    %c0 = arith.constant 0 : index
    %c0_0 = arith.constant 0 : index
    %c0_1 = arith.constant 0 : index
    %c0_2 = arith.constant 0 : index
    %0 = vector.load %arg2[%c0, %c0_0, %c0_1, %c0_2] : memref<1x3x8x128xf32, #tpu.memory_space<vmem>>, vector<1x1x8x128xf32>
    %1 = vector.shape_cast %0 : vector<1x1x8x128xf32> to vector<8x128xf32>
    %c0_3 = arith.constant 0 : index
    %c1 = arith.constant 1 : index
    %c0_4 = arith.constant 0 : index
    %c0_5 = arith.constant 0 : index
    %2 = vector.load %arg2[%c0_3, %c1, %c0_4, %c0_5] : memref<1x3x8x128xf32, #tpu.memory_space<vmem>>, vector<1x1x8x128xf32>
    %3 = vector.shape_cast %2 : vector<1x1x8x128xf32> to vector<8x128xf32>
    %c0_6 = arith.constant 0 : index
    %c2 = arith.constant 2 : index
    %c0_7 = arith.constant 0 : index
    %c0_8 = arith.constant 0 : index
    %4 = vector.load %arg2[%c0_6, %c2, %c0_7, %c0_8] : memref<1x3x8x128xf32, #tpu.memory_space<vmem>>, vector<1x1x8x128xf32>
    %5 = vector.shape_cast %4 : vector<1x1x8x128xf32> to vector<8x128xf32>
    %c0_9 = arith.constant 0 : index
    %c0_10 = arith.constant 0 : index
    %6 = vector.load %arg3[%c0_9, %c0_10] : memref<4x8xf32, #tpu.memory_space<vmem>>, vector<4x8xf32>
    %c0_11 = arith.constant 0 : index
    %c0_12 = arith.constant 0 : index
    %7 = vector.load %arg4[%c0_11, %c0_12] : memref<4x8xf32, #tpu.memory_space<vmem>>, vector<4x8xf32>
    %8 = vector.extract_strided_slice %1 {offsets = [0, 0], sizes = [1, 128], strides = [1, 1]} : vector<8x128xf32> to vector<1x128xf32>
    %9 = vector.shape_cast %8 : vector<1x128xf32> to vector<1x128xf32>
    %10 = vector.broadcast %9 : vector<1x128xf32> to vector<4x128xf32>
    %11 = vector.extract_strided_slice %6 {offsets = [0, 0], sizes = [4, 1], strides = [1, 1]} : vector<4x8xf32> to vector<4x1xf32>
    %12 = vector.broadcast %11 : vector<4x1xf32> to vector<4x128xf32>
    %13 = arith.mulf %10, %12 : vector<4x128xf32>
    %14 = vector.extract_strided_slice %7 {offsets = [0, 0], sizes = [4, 1], strides = [1, 1]} : vector<4x8xf32> to vector<4x1xf32>
    %15 = vector.broadcast %14 : vector<4x1xf32> to vector<4x128xf32>
    %16 = arith.mulf %10, %15 : vector<4x128xf32>
    %17 = vector.extract_strided_slice %1 {offsets = [1, 0], sizes = [1, 128], strides = [1, 1]} : vector<8x128xf32> to vector<1x128xf32>
    %18 = vector.shape_cast %17 : vector<1x128xf32> to vector<1x128xf32>
    %19 = vector.broadcast %18 : vector<1x128xf32> to vector<4x128xf32>
    %20 = vector.extract_strided_slice %6 {offsets = [0, 1], sizes = [4, 1], strides = [1, 1]} : vector<4x8xf32> to vector<4x1xf32>
    %21 = vector.broadcast %20 : vector<4x1xf32> to vector<4x128xf32>
    %22 = arith.mulf %19, %21 : vector<4x128xf32>
    %23 = vector.extract_strided_slice %7 {offsets = [0, 1], sizes = [4, 1], strides = [1, 1]} : vector<4x8xf32> to vector<4x1xf32>
    %24 = vector.broadcast %23 : vector<4x1xf32> to vector<4x128xf32>
    %25 = arith.mulf %19, %24 : vector<4x128xf32>
    %26 = arith.addf %13, %22 : vector<4x128xf32>
    %27 = arith.addf %16, %25 : vector<4x128xf32>
    %28 = vector.extract_strided_slice %1 {offsets = [2, 0], sizes = [1, 128], strides = [1, 1]} : vector<8x128xf32> to vector<1x128xf32>
    %29 = vector.shape_cast %28 : vector<1x128xf32> to vector<1x128xf32>
    %30 = vector.broadcast %29 : vector<1x128xf32> to vector<4x128xf32>
    %31 = vector.extract_strided_slice %6 {offsets = [0, 2], sizes = [4, 1], strides = [1, 1]} : vector<4x8xf32> to vector<4x1xf32>
    %32 = vector.broadcast %31 : vector<4x1xf32> to vector<4x128xf32>
    %33 = arith.mulf %30, %32 : vector<4x128xf32>
    %34 = vector.extract_strided_slice %7 {offsets = [0, 2], sizes = [4, 1], strides = [1, 1]} : vector<4x8xf32> to vector<4x1xf32>
    %35 = vector.broadcast %34 : vector<4x1xf32> to vector<4x128xf32>
    %36 = arith.mulf %30, %35 : vector<4x128xf32>
    %37 = arith.addf %26, %33 : vector<4x128xf32>
    %38 = arith.addf %27, %36 : vector<4x128xf32>
    %39 = vector.extract_strided_slice %1 {offsets = [3, 0], sizes = [1, 128], strides = [1, 1]} : vector<8x128xf32> to vector<1x128xf32>
    %40 = vector.shape_cast %39 : vector<1x128xf32> to vector<1x128xf32>
    %41 = vector.broadcast %40 : vector<1x128xf32> to vector<4x128xf32>
    %42 = vector.extract_strided_slice %6 {offsets = [0, 3], sizes = [4, 1], strides = [1, 1]} : vector<4x8xf32> to vector<4x1xf32>
    %43 = vector.broadcast %42 : vector<4x1xf32> to vector<4x128xf32>
    %44 = arith.mulf %41, %43 : vector<4x128xf32>
    %45 = vector.extract_strided_slice %7 {offsets = [0, 3], sizes = [4, 1], strides = [1, 1]} : vector<4x8xf32> to vector<4x1xf32>
    %46 = vector.broadcast %45 : vector<4x1xf32> to vector<4x128xf32>
    %47 = arith.mulf %41, %46 : vector<4x128xf32>
    %48 = arith.addf %37, %44 : vector<4x128xf32>
    %49 = arith.addf %38, %47 : vector<4x128xf32>
    %50 = vector.extract_strided_slice %1 {offsets = [4, 0], sizes = [1, 128], strides = [1, 1]} : vector<8x128xf32> to vector<1x128xf32>
    %51 = vector.shape_cast %50 : vector<1x128xf32> to vector<1x128xf32>
    %52 = vector.broadcast %51 : vector<1x128xf32> to vector<4x128xf32>
    %53 = vector.extract_strided_slice %6 {offsets = [0, 4], sizes = [4, 1], strides = [1, 1]} : vector<4x8xf32> to vector<4x1xf32>
    %54 = vector.broadcast %53 : vector<4x1xf32> to vector<4x128xf32>
    %55 = arith.mulf %52, %54 : vector<4x128xf32>
    %56 = vector.extract_strided_slice %7 {offsets = [0, 4], sizes = [4, 1], strides = [1, 1]} : vector<4x8xf32> to vector<4x1xf32>
    %57 = vector.broadcast %56 : vector<4x1xf32> to vector<4x128xf32>
    %58 = arith.mulf %52, %57 : vector<4x128xf32>
    %59 = arith.addf %48, %55 : vector<4x128xf32>
    %60 = arith.addf %49, %58 : vector<4x128xf32>
    %61 = vector.extract_strided_slice %1 {offsets = [5, 0], sizes = [1, 128], strides = [1, 1]} : vector<8x128xf32> to vector<1x128xf32>
    %62 = vector.shape_cast %61 : vector<1x128xf32> to vector<1x128xf32>
    %63 = vector.broadcast %62 : vector<1x128xf32> to vector<4x128xf32>
    %64 = vector.extract_strided_slice %6 {offsets = [0, 5], sizes = [4, 1], strides = [1, 1]} : vector<4x8xf32> to vector<4x1xf32>
    %65 = vector.broadcast %64 : vector<4x1xf32> to vector<4x128xf32>
    %66 = arith.mulf %63, %65 : vector<4x128xf32>
    %67 = vector.extract_strided_slice %7 {offsets = [0, 5], sizes = [4, 1], strides = [1, 1]} : vector<4x8xf32> to vector<4x1xf32>
    %68 = vector.broadcast %67 : vector<4x1xf32> to vector<4x128xf32>
    %69 = arith.mulf %63, %68 : vector<4x128xf32>
    %70 = arith.addf %59, %66 : vector<4x128xf32>
    %71 = arith.addf %60, %69 : vector<4x128xf32>
    %72 = vector.extract_strided_slice %1 {offsets = [6, 0], sizes = [1, 128], strides = [1, 1]} : vector<8x128xf32> to vector<1x128xf32>
    %73 = vector.shape_cast %72 : vector<1x128xf32> to vector<1x128xf32>
    %74 = vector.broadcast %73 : vector<1x128xf32> to vector<4x128xf32>
    %75 = vector.extract_strided_slice %6 {offsets = [0, 6], sizes = [4, 1], strides = [1, 1]} : vector<4x8xf32> to vector<4x1xf32>
    %76 = vector.broadcast %75 : vector<4x1xf32> to vector<4x128xf32>
    %77 = arith.mulf %74, %76 : vector<4x128xf32>
    %78 = vector.extract_strided_slice %7 {offsets = [0, 6], sizes = [4, 1], strides = [1, 1]} : vector<4x8xf32> to vector<4x1xf32>
    %79 = vector.broadcast %78 : vector<4x1xf32> to vector<4x128xf32>
    %80 = arith.mulf %74, %79 : vector<4x128xf32>
    %81 = arith.addf %70, %77 : vector<4x128xf32>
    %82 = arith.addf %71, %80 : vector<4x128xf32>
    %83 = vector.extract_strided_slice %1 {offsets = [7, 0], sizes = [1, 128], strides = [1, 1]} : vector<8x128xf32> to vector<1x128xf32>
    %84 = vector.shape_cast %83 : vector<1x128xf32> to vector<1x128xf32>
    %85 = vector.broadcast %84 : vector<1x128xf32> to vector<4x128xf32>
    %86 = vector.extract_strided_slice %6 {offsets = [0, 7], sizes = [4, 1], strides = [1, 1]} : vector<4x8xf32> to vector<4x1xf32>
    %87 = vector.broadcast %86 : vector<4x1xf32> to vector<4x128xf32>
    %88 = arith.mulf %85, %87 : vector<4x128xf32>
    %89 = vector.extract_strided_slice %7 {offsets = [0, 7], sizes = [4, 1], strides = [1, 1]} : vector<4x8xf32> to vector<4x1xf32>
    %90 = vector.broadcast %89 : vector<4x1xf32> to vector<4x128xf32>
    %91 = arith.mulf %85, %90 : vector<4x128xf32>
    %92 = arith.addf %81, %88 : vector<4x128xf32>
    %93 = arith.addf %82, %91 : vector<4x128xf32>
    %94 = vector.extract_strided_slice %3 {offsets = [0, 0], sizes = [1, 128], strides = [1, 1]} : vector<8x128xf32> to vector<1x128xf32>
    %95 = vector.shape_cast %94 : vector<1x128xf32> to vector<1x128xf32>
    %96 = vector.broadcast %95 : vector<1x128xf32> to vector<4x128xf32>
    %97 = vector.extract_strided_slice %6 {offsets = [0, 0], sizes = [4, 1], strides = [1, 1]} : vector<4x8xf32> to vector<4x1xf32>
    %98 = vector.broadcast %97 : vector<4x1xf32> to vector<4x128xf32>
    %99 = arith.mulf %96, %98 : vector<4x128xf32>
    %100 = vector.extract_strided_slice %7 {offsets = [0, 0], sizes = [4, 1], strides = [1, 1]} : vector<4x8xf32> to vector<4x1xf32>
    %101 = vector.broadcast %100 : vector<4x1xf32> to vector<4x128xf32>
    %102 = arith.mulf %96, %101 : vector<4x128xf32>
    %103 = vector.extract_strided_slice %3 {offsets = [1, 0], sizes = [1, 128], strides = [1, 1]} : vector<8x128xf32> to vector<1x128xf32>
    %104 = vector.shape_cast %103 : vector<1x128xf32> to vector<1x128xf32>
    %105 = vector.broadcast %104 : vector<1x128xf32> to vector<4x128xf32>
    %106 = vector.extract_strided_slice %6 {offsets = [0, 1], sizes = [4, 1], strides = [1, 1]} : vector<4x8xf32> to vector<4x1xf32>
    %107 = vector.broadcast %106 : vector<4x1xf32> to vector<4x128xf32>
    %108 = arith.mulf %105, %107 : vector<4x128xf32>
    %109 = vector.extract_strided_slice %7 {offsets = [0, 1], sizes = [4, 1], strides = [1, 1]} : vector<4x8xf32> to vector<4x1xf32>
    %110 = vector.broadcast %109 : vector<4x1xf32> to vector<4x128xf32>
    %111 = arith.mulf %105, %110 : vector<4x128xf32>
    %112 = arith.addf %99, %108 : vector<4x128xf32>
    %113 = arith.addf %102, %111 : vector<4x128xf32>
    %114 = vector.extract_strided_slice %3 {offsets = [2, 0], sizes = [1, 128], strides = [1, 1]} : vector<8x128xf32> to vector<1x128xf32>
    %115 = vector.shape_cast %114 : vector<1x128xf32> to vector<1x128xf32>
    %116 = vector.broadcast %115 : vector<1x128xf32> to vector<4x128xf32>
    %117 = vector.extract_strided_slice %6 {offsets = [0, 2], sizes = [4, 1], strides = [1, 1]} : vector<4x8xf32> to vector<4x1xf32>
    %118 = vector.broadcast %117 : vector<4x1xf32> to vector<4x128xf32>
    %119 = arith.mulf %116, %118 : vector<4x128xf32>
    %120 = vector.extract_strided_slice %7 {offsets = [0, 2], sizes = [4, 1], strides = [1, 1]} : vector<4x8xf32> to vector<4x1xf32>
    %121 = vector.broadcast %120 : vector<4x1xf32> to vector<4x128xf32>
    %122 = arith.mulf %116, %121 : vector<4x128xf32>
    %123 = arith.addf %112, %119 : vector<4x128xf32>
    %124 = arith.addf %113, %122 : vector<4x128xf32>
    %125 = vector.extract_strided_slice %3 {offsets = [3, 0], sizes = [1, 128], strides = [1, 1]} : vector<8x128xf32> to vector<1x128xf32>
    %126 = vector.shape_cast %125 : vector<1x128xf32> to vector<1x128xf32>
    %127 = vector.broadcast %126 : vector<1x128xf32> to vector<4x128xf32>
    %128 = vector.extract_strided_slice %6 {offsets = [0, 3], sizes = [4, 1], strides = [1, 1]} : vector<4x8xf32> to vector<4x1xf32>
    %129 = vector.broadcast %128 : vector<4x1xf32> to vector<4x128xf32>
    %130 = arith.mulf %127, %129 : vector<4x128xf32>
    %131 = vector.extract_strided_slice %7 {offsets = [0, 3], sizes = [4, 1], strides = [1, 1]} : vector<4x8xf32> to vector<4x1xf32>
    %132 = vector.broadcast %131 : vector<4x1xf32> to vector<4x128xf32>
    %133 = arith.mulf %127, %132 : vector<4x128xf32>
    %134 = arith.addf %123, %130 : vector<4x128xf32>
    %135 = arith.addf %124, %133 : vector<4x128xf32>
    %136 = vector.extract_strided_slice %3 {offsets = [4, 0], sizes = [1, 128], strides = [1, 1]} : vector<8x128xf32> to vector<1x128xf32>
    %137 = vector.shape_cast %136 : vector<1x128xf32> to vector<1x128xf32>
    %138 = vector.broadcast %137 : vector<1x128xf32> to vector<4x128xf32>
    %139 = vector.extract_strided_slice %6 {offsets = [0, 4], sizes = [4, 1], strides = [1, 1]} : vector<4x8xf32> to vector<4x1xf32>
    %140 = vector.broadcast %139 : vector<4x1xf32> to vector<4x128xf32>
    %141 = arith.mulf %138, %140 : vector<4x128xf32>
    %142 = vector.extract_strided_slice %7 {offsets = [0, 4], sizes = [4, 1], strides = [1, 1]} : vector<4x8xf32> to vector<4x1xf32>
    %143 = vector.broadcast %142 : vector<4x1xf32> to vector<4x128xf32>
    %144 = arith.mulf %138, %143 : vector<4x128xf32>
    %145 = arith.addf %134, %141 : vector<4x128xf32>
    %146 = arith.addf %135, %144 : vector<4x128xf32>
    %147 = vector.extract_strided_slice %3 {offsets = [5, 0], sizes = [1, 128], strides = [1, 1]} : vector<8x128xf32> to vector<1x128xf32>
    %148 = vector.shape_cast %147 : vector<1x128xf32> to vector<1x128xf32>
    %149 = vector.broadcast %148 : vector<1x128xf32> to vector<4x128xf32>
    %150 = vector.extract_strided_slice %6 {offsets = [0, 5], sizes = [4, 1], strides = [1, 1]} : vector<4x8xf32> to vector<4x1xf32>
    %151 = vector.broadcast %150 : vector<4x1xf32> to vector<4x128xf32>
    %152 = arith.mulf %149, %151 : vector<4x128xf32>
    %153 = vector.extract_strided_slice %7 {offsets = [0, 5], sizes = [4, 1], strides = [1, 1]} : vector<4x8xf32> to vector<4x1xf32>
    %154 = vector.broadcast %153 : vector<4x1xf32> to vector<4x128xf32>
    %155 = arith.mulf %149, %154 : vector<4x128xf32>
    %156 = arith.addf %145, %152 : vector<4x128xf32>
    %157 = arith.addf %146, %155 : vector<4x128xf32>
    %158 = vector.extract_strided_slice %3 {offsets = [6, 0], sizes = [1, 128], strides = [1, 1]} : vector<8x128xf32> to vector<1x128xf32>
    %159 = vector.shape_cast %158 : vector<1x128xf32> to vector<1x128xf32>
    %160 = vector.broadcast %159 : vector<1x128xf32> to vector<4x128xf32>
    %161 = vector.extract_strided_slice %6 {offsets = [0, 6], sizes = [4, 1], strides = [1, 1]} : vector<4x8xf32> to vector<4x1xf32>
    %162 = vector.broadcast %161 : vector<4x1xf32> to vector<4x128xf32>
    %163 = arith.mulf %160, %162 : vector<4x128xf32>
    %164 = vector.extract_strided_slice %7 {offsets = [0, 6], sizes = [4, 1], strides = [1, 1]} : vector<4x8xf32> to vector<4x1xf32>
    %165 = vector.broadcast %164 : vector<4x1xf32> to vector<4x128xf32>
    %166 = arith.mulf %160, %165 : vector<4x128xf32>
    %167 = arith.addf %156, %163 : vector<4x128xf32>
    %168 = arith.addf %157, %166 : vector<4x128xf32>
    %169 = vector.extract_strided_slice %3 {offsets = [7, 0], sizes = [1, 128], strides = [1, 1]} : vector<8x128xf32> to vector<1x128xf32>
    %170 = vector.shape_cast %169 : vector<1x128xf32> to vector<1x128xf32>
    %171 = vector.broadcast %170 : vector<1x128xf32> to vector<4x128xf32>
    %172 = vector.extract_strided_slice %6 {offsets = [0, 7], sizes = [4, 1], strides = [1, 1]} : vector<4x8xf32> to vector<4x1xf32>
    %173 = vector.broadcast %172 : vector<4x1xf32> to vector<4x128xf32>
    %174 = arith.mulf %171, %173 : vector<4x128xf32>
    %175 = vector.extract_strided_slice %7 {offsets = [0, 7], sizes = [4, 1], strides = [1, 1]} : vector<4x8xf32> to vector<4x1xf32>
    %176 = vector.broadcast %175 : vector<4x1xf32> to vector<4x128xf32>
    %177 = arith.mulf %171, %176 : vector<4x128xf32>
    %178 = arith.addf %167, %174 : vector<4x128xf32>
    %179 = arith.addf %168, %177 : vector<4x128xf32>
    %180 = vector.extract_strided_slice %5 {offsets = [0, 0], sizes = [1, 128], strides = [1, 1]} : vector<8x128xf32> to vector<1x128xf32>
    %181 = vector.shape_cast %180 : vector<1x128xf32> to vector<1x128xf32>
    %182 = vector.broadcast %181 : vector<1x128xf32> to vector<4x128xf32>
    %183 = vector.extract_strided_slice %6 {offsets = [0, 0], sizes = [4, 1], strides = [1, 1]} : vector<4x8xf32> to vector<4x1xf32>
    %184 = vector.broadcast %183 : vector<4x1xf32> to vector<4x128xf32>
    %185 = arith.mulf %182, %184 : vector<4x128xf32>
    %186 = vector.extract_strided_slice %7 {offsets = [0, 0], sizes = [4, 1], strides = [1, 1]} : vector<4x8xf32> to vector<4x1xf32>
    %187 = vector.broadcast %186 : vector<4x1xf32> to vector<4x128xf32>
    %188 = arith.mulf %182, %187 : vector<4x128xf32>
    %189 = vector.extract_strided_slice %5 {offsets = [1, 0], sizes = [1, 128], strides = [1, 1]} : vector<8x128xf32> to vector<1x128xf32>
    %190 = vector.shape_cast %189 : vector<1x128xf32> to vector<1x128xf32>
    %191 = vector.broadcast %190 : vector<1x128xf32> to vector<4x128xf32>
    %192 = vector.extract_strided_slice %6 {offsets = [0, 1], sizes = [4, 1], strides = [1, 1]} : vector<4x8xf32> to vector<4x1xf32>
    %193 = vector.broadcast %192 : vector<4x1xf32> to vector<4x128xf32>
    %194 = arith.mulf %191, %193 : vector<4x128xf32>
    %195 = vector.extract_strided_slice %7 {offsets = [0, 1], sizes = [4, 1], strides = [1, 1]} : vector<4x8xf32> to vector<4x1xf32>
    %196 = vector.broadcast %195 : vector<4x1xf32> to vector<4x128xf32>
    %197 = arith.mulf %191, %196 : vector<4x128xf32>
    %198 = arith.addf %185, %194 : vector<4x128xf32>
    %199 = arith.addf %188, %197 : vector<4x128xf32>
    %200 = vector.extract_strided_slice %5 {offsets = [2, 0], sizes = [1, 128], strides = [1, 1]} : vector<8x128xf32> to vector<1x128xf32>
    %201 = vector.shape_cast %200 : vector<1x128xf32> to vector<1x128xf32>
    %202 = vector.broadcast %201 : vector<1x128xf32> to vector<4x128xf32>
    %203 = vector.extract_strided_slice %6 {offsets = [0, 2], sizes = [4, 1], strides = [1, 1]} : vector<4x8xf32> to vector<4x1xf32>
    %204 = vector.broadcast %203 : vector<4x1xf32> to vector<4x128xf32>
    %205 = arith.mulf %202, %204 : vector<4x128xf32>
    %206 = vector.extract_strided_slice %7 {offsets = [0, 2], sizes = [4, 1], strides = [1, 1]} : vector<4x8xf32> to vector<4x1xf32>
    %207 = vector.broadcast %206 : vector<4x1xf32> to vector<4x128xf32>
    %208 = arith.mulf %202, %207 : vector<4x128xf32>
    %209 = arith.addf %198, %205 : vector<4x128xf32>
    %210 = arith.addf %199, %208 : vector<4x128xf32>
    %211 = vector.extract_strided_slice %5 {offsets = [3, 0], sizes = [1, 128], strides = [1, 1]} : vector<8x128xf32> to vector<1x128xf32>
    %212 = vector.shape_cast %211 : vector<1x128xf32> to vector<1x128xf32>
    %213 = vector.broadcast %212 : vector<1x128xf32> to vector<4x128xf32>
    %214 = vector.extract_strided_slice %6 {offsets = [0, 3], sizes = [4, 1], strides = [1, 1]} : vector<4x8xf32> to vector<4x1xf32>
    %215 = vector.broadcast %214 : vector<4x1xf32> to vector<4x128xf32>
    %216 = arith.mulf %213, %215 : vector<4x128xf32>
    %217 = vector.extract_strided_slice %7 {offsets = [0, 3], sizes = [4, 1], strides = [1, 1]} : vector<4x8xf32> to vector<4x1xf32>
    %218 = vector.broadcast %217 : vector<4x1xf32> to vector<4x128xf32>
    %219 = arith.mulf %213, %218 : vector<4x128xf32>
    %220 = arith.addf %209, %216 : vector<4x128xf32>
    %221 = arith.addf %210, %219 : vector<4x128xf32>
    %222 = vector.extract_strided_slice %5 {offsets = [4, 0], sizes = [1, 128], strides = [1, 1]} : vector<8x128xf32> to vector<1x128xf32>
    %223 = vector.shape_cast %222 : vector<1x128xf32> to vector<1x128xf32>
    %224 = vector.broadcast %223 : vector<1x128xf32> to vector<4x128xf32>
    %225 = vector.extract_strided_slice %6 {offsets = [0, 4], sizes = [4, 1], strides = [1, 1]} : vector<4x8xf32> to vector<4x1xf32>
    %226 = vector.broadcast %225 : vector<4x1xf32> to vector<4x128xf32>
    %227 = arith.mulf %224, %226 : vector<4x128xf32>
    %228 = vector.extract_strided_slice %7 {offsets = [0, 4], sizes = [4, 1], strides = [1, 1]} : vector<4x8xf32> to vector<4x1xf32>
    %229 = vector.broadcast %228 : vector<4x1xf32> to vector<4x128xf32>
    %230 = arith.mulf %224, %229 : vector<4x128xf32>
    %231 = arith.addf %220, %227 : vector<4x128xf32>
    %232 = arith.addf %221, %230 : vector<4x128xf32>
    %233 = vector.extract_strided_slice %5 {offsets = [5, 0], sizes = [1, 128], strides = [1, 1]} : vector<8x128xf32> to vector<1x128xf32>
    %234 = vector.shape_cast %233 : vector<1x128xf32> to vector<1x128xf32>
    %235 = vector.broadcast %234 : vector<1x128xf32> to vector<4x128xf32>
    %236 = vector.extract_strided_slice %6 {offsets = [0, 5], sizes = [4, 1], strides = [1, 1]} : vector<4x8xf32> to vector<4x1xf32>
    %237 = vector.broadcast %236 : vector<4x1xf32> to vector<4x128xf32>
    %238 = arith.mulf %235, %237 : vector<4x128xf32>
    %239 = vector.extract_strided_slice %7 {offsets = [0, 5], sizes = [4, 1], strides = [1, 1]} : vector<4x8xf32> to vector<4x1xf32>
    %240 = vector.broadcast %239 : vector<4x1xf32> to vector<4x128xf32>
    %241 = arith.mulf %235, %240 : vector<4x128xf32>
    %242 = arith.addf %231, %238 : vector<4x128xf32>
    %243 = arith.addf %232, %241 : vector<4x128xf32>
    %244 = vector.extract_strided_slice %5 {offsets = [6, 0], sizes = [1, 128], strides = [1, 1]} : vector<8x128xf32> to vector<1x128xf32>
    %245 = vector.shape_cast %244 : vector<1x128xf32> to vector<1x128xf32>
    %246 = vector.broadcast %245 : vector<1x128xf32> to vector<4x128xf32>
    %247 = vector.extract_strided_slice %6 {offsets = [0, 6], sizes = [4, 1], strides = [1, 1]} : vector<4x8xf32> to vector<4x1xf32>
    %248 = vector.broadcast %247 : vector<4x1xf32> to vector<4x128xf32>
    %249 = arith.mulf %246, %248 : vector<4x128xf32>
    %250 = vector.extract_strided_slice %7 {offsets = [0, 6], sizes = [4, 1], strides = [1, 1]} : vector<4x8xf32> to vector<4x1xf32>
    %251 = vector.broadcast %250 : vector<4x1xf32> to vector<4x128xf32>
    %252 = arith.mulf %246, %251 : vector<4x128xf32>
    %253 = arith.addf %242, %249 : vector<4x128xf32>
    %254 = arith.addf %243, %252 : vector<4x128xf32>
    %255 = vector.extract_strided_slice %5 {offsets = [7, 0], sizes = [1, 128], strides = [1, 1]} : vector<8x128xf32> to vector<1x128xf32>
    %256 = vector.shape_cast %255 : vector<1x128xf32> to vector<1x128xf32>
    %257 = vector.broadcast %256 : vector<1x128xf32> to vector<4x128xf32>
    %258 = vector.extract_strided_slice %6 {offsets = [0, 7], sizes = [4, 1], strides = [1, 1]} : vector<4x8xf32> to vector<4x1xf32>
    %259 = vector.broadcast %258 : vector<4x1xf32> to vector<4x128xf32>
    %260 = arith.mulf %257, %259 : vector<4x128xf32>
    %261 = vector.extract_strided_slice %7 {offsets = [0, 7], sizes = [4, 1], strides = [1, 1]} : vector<4x8xf32> to vector<4x1xf32>
    %262 = vector.broadcast %261 : vector<4x1xf32> to vector<4x128xf32>
    %263 = arith.mulf %257, %262 : vector<4x128xf32>
    %264 = arith.addf %253, %260 : vector<4x128xf32>
    %265 = arith.addf %254, %263 : vector<4x128xf32>
    %266 = arith.mulf %92, %93 : vector<4x128xf32>
    %267 = arith.mulf %178, %179 : vector<4x128xf32>
    %268 = arith.addf %266, %267 : vector<4x128xf32>
    %269 = arith.mulf %264, %265 : vector<4x128xf32>
    %270 = arith.addf %268, %269 : vector<4x128xf32>
    %271 = arith.mulf %93, %93 : vector<4x128xf32>
    %272 = arith.mulf %179, %179 : vector<4x128xf32>
    %273 = arith.addf %271, %272 : vector<4x128xf32>
    %274 = arith.mulf %265, %265 : vector<4x128xf32>
    %275 = arith.addf %273, %274 : vector<4x128xf32>
    %cst = arith.constant 0.000000e+00 : f32
    %276 = vector.broadcast %cst : f32 to vector<4x128xf32>
    %277 = arith.cmpf oge, %270, %276 : vector<4x128xf32>
    %278 = arith.extui %277 : vector<4x128xi1> to vector<4x128xi32>
    %279 = arith.sitofp %278 : vector<4x128xi32> to vector<4x128xf32>
    %cst_13 = arith.constant 1.000000e+00 : f32
    %280 = vector.broadcast %cst_13 : f32 to vector<4x128xf32>
    %281 = arith.subf %280, %279 : vector<4x128xf32>
    %cst_14 = arith.constant 9.99999996E-13 : f32
    %282 = vector.broadcast %cst_14 : f32 to vector<4x128xf32>
    %283 = arith.addf %275, %282 : vector<4x128xf32>
    %284 = arith.divf %270, %283 : vector<4x128xf32>
    %285 = arith.mulf %281, %284 : vector<4x128xf32>
    %cst_15 = arith.constant 2.000000e-01 : f32
    %286 = vector.broadcast %cst_15 : f32 to vector<4x128xf32>
    %287 = arith.mulf %286, %92 : vector<4x128xf32>
    %288 = arith.mulf %285, %93 : vector<4x128xf32>
    %289 = arith.subf %92, %288 : vector<4x128xf32>
    %cst_16 = arith.constant 8.000000e-01 : f32
    %290 = vector.broadcast %cst_16 : f32 to vector<4x128xf32>
    %291 = arith.mulf %290, %289 : vector<4x128xf32>
    %292 = arith.addf %287, %291 : vector<4x128xf32>
    %cst_17 = arith.constant 2.000000e-01 : f32
    %293 = vector.broadcast %cst_17 : f32 to vector<4x128xf32>
    %294 = arith.mulf %293, %178 : vector<4x128xf32>
    %295 = arith.mulf %285, %179 : vector<4x128xf32>
    %296 = arith.subf %178, %295 : vector<4x128xf32>
    %cst_18 = arith.constant 8.000000e-01 : f32
    %297 = vector.broadcast %cst_18 : f32 to vector<4x128xf32>
    %298 = arith.mulf %297, %296 : vector<4x128xf32>
    %299 = arith.addf %294, %298 : vector<4x128xf32>
    %cst_19 = arith.constant 2.000000e-01 : f32
    %300 = vector.broadcast %cst_19 : f32 to vector<4x128xf32>
    %301 = arith.mulf %300, %264 : vector<4x128xf32>
    %302 = arith.mulf %285, %265 : vector<4x128xf32>
    %303 = arith.subf %264, %302 : vector<4x128xf32>
    %cst_20 = arith.constant 8.000000e-01 : f32
    %304 = vector.broadcast %cst_20 : f32 to vector<4x128xf32>
    %305 = arith.mulf %304, %303 : vector<4x128xf32>
    %306 = arith.addf %301, %305 : vector<4x128xf32>
    %c0_21 = arith.constant 0 : index
    %c0_22 = arith.constant 0 : index
    %307 = vector.load %arg5[%c0_21, %c0_22] : memref<2x4xf32, #tpu.memory_space<vmem>>, vector<2x4xf32>
    %c0_23 = arith.constant 0 : index
    %c0_24 = arith.constant 0 : index
    %308 = vector.load %arg6[%c0_23, %c0_24] : memref<2x4xf32, #tpu.memory_space<vmem>>, vector<2x4xf32>
    %309 = vector.extract_strided_slice %292 {offsets = [0, 0], sizes = [1, 128], strides = [1, 1]} : vector<4x128xf32> to vector<1x128xf32>
    %310 = vector.shape_cast %309 : vector<1x128xf32> to vector<1x128xf32>
    %311 = vector.broadcast %310 : vector<1x128xf32> to vector<2x128xf32>
    %312 = vector.extract_strided_slice %307 {offsets = [0, 0], sizes = [2, 1], strides = [1, 1]} : vector<2x4xf32> to vector<2x1xf32>
    %313 = vector.broadcast %312 : vector<2x1xf32> to vector<2x128xf32>
    %314 = arith.mulf %311, %313 : vector<2x128xf32>
    %315 = vector.extract_strided_slice %308 {offsets = [0, 0], sizes = [2, 1], strides = [1, 1]} : vector<2x4xf32> to vector<2x1xf32>
    %316 = vector.broadcast %315 : vector<2x1xf32> to vector<2x128xf32>
    %317 = arith.mulf %311, %316 : vector<2x128xf32>
    %318 = vector.extract_strided_slice %292 {offsets = [1, 0], sizes = [1, 128], strides = [1, 1]} : vector<4x128xf32> to vector<1x128xf32>
    %319 = vector.shape_cast %318 : vector<1x128xf32> to vector<1x128xf32>
    %320 = vector.broadcast %319 : vector<1x128xf32> to vector<2x128xf32>
    %321 = vector.extract_strided_slice %307 {offsets = [0, 1], sizes = [2, 1], strides = [1, 1]} : vector<2x4xf32> to vector<2x1xf32>
    %322 = vector.broadcast %321 : vector<2x1xf32> to vector<2x128xf32>
    %323 = arith.mulf %320, %322 : vector<2x128xf32>
    %324 = vector.extract_strided_slice %308 {offsets = [0, 1], sizes = [2, 1], strides = [1, 1]} : vector<2x4xf32> to vector<2x1xf32>
    %325 = vector.broadcast %324 : vector<2x1xf32> to vector<2x128xf32>
    %326 = arith.mulf %320, %325 : vector<2x128xf32>
    %327 = arith.addf %314, %323 : vector<2x128xf32>
    %328 = arith.addf %317, %326 : vector<2x128xf32>
    %329 = vector.extract_strided_slice %292 {offsets = [2, 0], sizes = [1, 128], strides = [1, 1]} : vector<4x128xf32> to vector<1x128xf32>
    %330 = vector.shape_cast %329 : vector<1x128xf32> to vector<1x128xf32>
    %331 = vector.broadcast %330 : vector<1x128xf32> to vector<2x128xf32>
    %332 = vector.extract_strided_slice %307 {offsets = [0, 2], sizes = [2, 1], strides = [1, 1]} : vector<2x4xf32> to vector<2x1xf32>
    %333 = vector.broadcast %332 : vector<2x1xf32> to vector<2x128xf32>
    %334 = arith.mulf %331, %333 : vector<2x128xf32>
    %335 = vector.extract_strided_slice %308 {offsets = [0, 2], sizes = [2, 1], strides = [1, 1]} : vector<2x4xf32> to vector<2x1xf32>
    %336 = vector.broadcast %335 : vector<2x1xf32> to vector<2x128xf32>
    %337 = arith.mulf %331, %336 : vector<2x128xf32>
    %338 = arith.addf %327, %334 : vector<2x128xf32>
    %339 = arith.addf %328, %337 : vector<2x128xf32>
    %340 = vector.extract_strided_slice %292 {offsets = [3, 0], sizes = [1, 128], strides = [1, 1]} : vector<4x128xf32> to vector<1x128xf32>
    %341 = vector.shape_cast %340 : vector<1x128xf32> to vector<1x128xf32>
    %342 = vector.broadcast %341 : vector<1x128xf32> to vector<2x128xf32>
    %343 = vector.extract_strided_slice %307 {offsets = [0, 3], sizes = [2, 1], strides = [1, 1]} : vector<2x4xf32> to vector<2x1xf32>
    %344 = vector.broadcast %343 : vector<2x1xf32> to vector<2x128xf32>
    %345 = arith.mulf %342, %344 : vector<2x128xf32>
    %346 = vector.extract_strided_slice %308 {offsets = [0, 3], sizes = [2, 1], strides = [1, 1]} : vector<2x4xf32> to vector<2x1xf32>
    %347 = vector.broadcast %346 : vector<2x1xf32> to vector<2x128xf32>
    %348 = arith.mulf %342, %347 : vector<2x128xf32>
    %349 = arith.addf %338, %345 : vector<2x128xf32>
    %350 = arith.addf %339, %348 : vector<2x128xf32>
    %351 = vector.extract_strided_slice %299 {offsets = [0, 0], sizes = [1, 128], strides = [1, 1]} : vector<4x128xf32> to vector<1x128xf32>
    %352 = vector.shape_cast %351 : vector<1x128xf32> to vector<1x128xf32>
    %353 = vector.broadcast %352 : vector<1x128xf32> to vector<2x128xf32>
    %354 = vector.extract_strided_slice %307 {offsets = [0, 0], sizes = [2, 1], strides = [1, 1]} : vector<2x4xf32> to vector<2x1xf32>
    %355 = vector.broadcast %354 : vector<2x1xf32> to vector<2x128xf32>
    %356 = arith.mulf %353, %355 : vector<2x128xf32>
    %357 = vector.extract_strided_slice %308 {offsets = [0, 0], sizes = [2, 1], strides = [1, 1]} : vector<2x4xf32> to vector<2x1xf32>
    %358 = vector.broadcast %357 : vector<2x1xf32> to vector<2x128xf32>
    %359 = arith.mulf %353, %358 : vector<2x128xf32>
    %360 = vector.extract_strided_slice %299 {offsets = [1, 0], sizes = [1, 128], strides = [1, 1]} : vector<4x128xf32> to vector<1x128xf32>
    %361 = vector.shape_cast %360 : vector<1x128xf32> to vector<1x128xf32>
    %362 = vector.broadcast %361 : vector<1x128xf32> to vector<2x128xf32>
    %363 = vector.extract_strided_slice %307 {offsets = [0, 1], sizes = [2, 1], strides = [1, 1]} : vector<2x4xf32> to vector<2x1xf32>
    %364 = vector.broadcast %363 : vector<2x1xf32> to vector<2x128xf32>
    %365 = arith.mulf %362, %364 : vector<2x128xf32>
    %366 = vector.extract_strided_slice %308 {offsets = [0, 1], sizes = [2, 1], strides = [1, 1]} : vector<2x4xf32> to vector<2x1xf32>
    %367 = vector.broadcast %366 : vector<2x1xf32> to vector<2x128xf32>
    %368 = arith.mulf %362, %367 : vector<2x128xf32>
    %369 = arith.addf %356, %365 : vector<2x128xf32>
    %370 = arith.addf %359, %368 : vector<2x128xf32>
    %371 = vector.extract_strided_slice %299 {offsets = [2, 0], sizes = [1, 128], strides = [1, 1]} : vector<4x128xf32> to vector<1x128xf32>
    %372 = vector.shape_cast %371 : vector<1x128xf32> to vector<1x128xf32>
    %373 = vector.broadcast %372 : vector<1x128xf32> to vector<2x128xf32>
    %374 = vector.extract_strided_slice %307 {offsets = [0, 2], sizes = [2, 1], strides = [1, 1]} : vector<2x4xf32> to vector<2x1xf32>
    %375 = vector.broadcast %374 : vector<2x1xf32> to vector<2x128xf32>
    %376 = arith.mulf %373, %375 : vector<2x128xf32>
    %377 = vector.extract_strided_slice %308 {offsets = [0, 2], sizes = [2, 1], strides = [1, 1]} : vector<2x4xf32> to vector<2x1xf32>
    %378 = vector.broadcast %377 : vector<2x1xf32> to vector<2x128xf32>
    %379 = arith.mulf %373, %378 : vector<2x128xf32>
    %380 = arith.addf %369, %376 : vector<2x128xf32>
    %381 = arith.addf %370, %379 : vector<2x128xf32>
    %382 = vector.extract_strided_slice %299 {offsets = [3, 0], sizes = [1, 128], strides = [1, 1]} : vector<4x128xf32> to vector<1x128xf32>
    %383 = vector.shape_cast %382 : vector<1x128xf32> to vector<1x128xf32>
    %384 = vector.broadcast %383 : vector<1x128xf32> to vector<2x128xf32>
    %385 = vector.extract_strided_slice %307 {offsets = [0, 3], sizes = [2, 1], strides = [1, 1]} : vector<2x4xf32> to vector<2x1xf32>
    %386 = vector.broadcast %385 : vector<2x1xf32> to vector<2x128xf32>
    %387 = arith.mulf %384, %386 : vector<2x128xf32>
    %388 = vector.extract_strided_slice %308 {offsets = [0, 3], sizes = [2, 1], strides = [1, 1]} : vector<2x4xf32> to vector<2x1xf32>
    %389 = vector.broadcast %388 : vector<2x1xf32> to vector<2x128xf32>
    %390 = arith.mulf %384, %389 : vector<2x128xf32>
    %391 = arith.addf %380, %387 : vector<2x128xf32>
    %392 = arith.addf %381, %390 : vector<2x128xf32>
    %393 = vector.extract_strided_slice %306 {offsets = [0, 0], sizes = [1, 128], strides = [1, 1]} : vector<4x128xf32> to vector<1x128xf32>
    %394 = vector.shape_cast %393 : vector<1x128xf32> to vector<1x128xf32>
    %395 = vector.broadcast %394 : vector<1x128xf32> to vector<2x128xf32>
    %396 = vector.extract_strided_slice %307 {offsets = [0, 0], sizes = [2, 1], strides = [1, 1]} : vector<2x4xf32> to vector<2x1xf32>
    %397 = vector.broadcast %396 : vector<2x1xf32> to vector<2x128xf32>
    %398 = arith.mulf %395, %397 : vector<2x128xf32>
    %399 = vector.extract_strided_slice %308 {offsets = [0, 0], sizes = [2, 1], strides = [1, 1]} : vector<2x4xf32> to vector<2x1xf32>
    %400 = vector.broadcast %399 : vector<2x1xf32> to vector<2x128xf32>
    %401 = arith.mulf %395, %400 : vector<2x128xf32>
    %402 = vector.extract_strided_slice %306 {offsets = [1, 0], sizes = [1, 128], strides = [1, 1]} : vector<4x128xf32> to vector<1x128xf32>
    %403 = vector.shape_cast %402 : vector<1x128xf32> to vector<1x128xf32>
    %404 = vector.broadcast %403 : vector<1x128xf32> to vector<2x128xf32>
    %405 = vector.extract_strided_slice %307 {offsets = [0, 1], sizes = [2, 1], strides = [1, 1]} : vector<2x4xf32> to vector<2x1xf32>
    %406 = vector.broadcast %405 : vector<2x1xf32> to vector<2x128xf32>
    %407 = arith.mulf %404, %406 : vector<2x128xf32>
    %408 = vector.extract_strided_slice %308 {offsets = [0, 1], sizes = [2, 1], strides = [1, 1]} : vector<2x4xf32> to vector<2x1xf32>
    %409 = vector.broadcast %408 : vector<2x1xf32> to vector<2x128xf32>
    %410 = arith.mulf %404, %409 : vector<2x128xf32>
    %411 = arith.addf %398, %407 : vector<2x128xf32>
    %412 = arith.addf %401, %410 : vector<2x128xf32>
    %413 = vector.extract_strided_slice %306 {offsets = [2, 0], sizes = [1, 128], strides = [1, 1]} : vector<4x128xf32> to vector<1x128xf32>
    %414 = vector.shape_cast %413 : vector<1x128xf32> to vector<1x128xf32>
    %415 = vector.broadcast %414 : vector<1x128xf32> to vector<2x128xf32>
    %416 = vector.extract_strided_slice %307 {offsets = [0, 2], sizes = [2, 1], strides = [1, 1]} : vector<2x4xf32> to vector<2x1xf32>
    %417 = vector.broadcast %416 : vector<2x1xf32> to vector<2x128xf32>
    %418 = arith.mulf %415, %417 : vector<2x128xf32>
    %419 = vector.extract_strided_slice %308 {offsets = [0, 2], sizes = [2, 1], strides = [1, 1]} : vector<2x4xf32> to vector<2x1xf32>
    %420 = vector.broadcast %419 : vector<2x1xf32> to vector<2x128xf32>
    %421 = arith.mulf %415, %420 : vector<2x128xf32>
    %422 = arith.addf %411, %418 : vector<2x128xf32>
    %423 = arith.addf %412, %421 : vector<2x128xf32>
    %424 = vector.extract_strided_slice %306 {offsets = [3, 0], sizes = [1, 128], strides = [1, 1]} : vector<4x128xf32> to vector<1x128xf32>
    %425 = vector.shape_cast %424 : vector<1x128xf32> to vector<1x128xf32>
    %426 = vector.broadcast %425 : vector<1x128xf32> to vector<2x128xf32>
    %427 = vector.extract_strided_slice %307 {offsets = [0, 3], sizes = [2, 1], strides = [1, 1]} : vector<2x4xf32> to vector<2x1xf32>
    %428 = vector.broadcast %427 : vector<2x1xf32> to vector<2x128xf32>
    %429 = arith.mulf %426, %428 : vector<2x128xf32>
    %430 = vector.extract_strided_slice %308 {offsets = [0, 3], sizes = [2, 1], strides = [1, 1]} : vector<2x4xf32> to vector<2x1xf32>
    %431 = vector.broadcast %430 : vector<2x1xf32> to vector<2x128xf32>
    %432 = arith.mulf %426, %431 : vector<2x128xf32>
    %433 = arith.addf %422, %429 : vector<2x128xf32>
    %434 = arith.addf %423, %432 : vector<2x128xf32>
    %435 = arith.mulf %349, %350 : vector<2x128xf32>
    %436 = arith.mulf %391, %392 : vector<2x128xf32>
    %437 = arith.addf %435, %436 : vector<2x128xf32>
    %438 = arith.mulf %433, %434 : vector<2x128xf32>
    %439 = arith.addf %437, %438 : vector<2x128xf32>
    %440 = arith.mulf %350, %350 : vector<2x128xf32>
    %441 = arith.mulf %392, %392 : vector<2x128xf32>
    %442 = arith.addf %440, %441 : vector<2x128xf32>
    %443 = arith.mulf %434, %434 : vector<2x128xf32>
    %444 = arith.addf %442, %443 : vector<2x128xf32>
    %cst_25 = arith.constant 0.000000e+00 : f32
    %445 = vector.broadcast %cst_25 : f32 to vector<2x128xf32>
    %446 = arith.cmpf oge, %439, %445 : vector<2x128xf32>
    %447 = arith.extui %446 : vector<2x128xi1> to vector<2x128xi32>
    %448 = arith.sitofp %447 : vector<2x128xi32> to vector<2x128xf32>
    %cst_26 = arith.constant 1.000000e+00 : f32
    %449 = vector.broadcast %cst_26 : f32 to vector<2x128xf32>
    %450 = arith.subf %449, %448 : vector<2x128xf32>
    %cst_27 = arith.constant 9.99999996E-13 : f32
    %451 = vector.broadcast %cst_27 : f32 to vector<2x128xf32>
    %452 = arith.addf %444, %451 : vector<2x128xf32>
    %453 = arith.divf %439, %452 : vector<2x128xf32>
    %454 = arith.mulf %450, %453 : vector<2x128xf32>
    %cst_28 = arith.constant 2.000000e-01 : f32
    %455 = vector.broadcast %cst_28 : f32 to vector<2x128xf32>
    %456 = arith.mulf %455, %349 : vector<2x128xf32>
    %457 = arith.mulf %454, %350 : vector<2x128xf32>
    %458 = arith.subf %349, %457 : vector<2x128xf32>
    %cst_29 = arith.constant 8.000000e-01 : f32
    %459 = vector.broadcast %cst_29 : f32 to vector<2x128xf32>
    %460 = arith.mulf %459, %458 : vector<2x128xf32>
    %461 = arith.addf %456, %460 : vector<2x128xf32>
    %cst_30 = arith.constant 2.000000e-01 : f32
    %462 = vector.broadcast %cst_30 : f32 to vector<2x128xf32>
    %463 = arith.mulf %462, %391 : vector<2x128xf32>
    %464 = arith.mulf %454, %392 : vector<2x128xf32>
    %465 = arith.subf %391, %464 : vector<2x128xf32>
    %cst_31 = arith.constant 8.000000e-01 : f32
    %466 = vector.broadcast %cst_31 : f32 to vector<2x128xf32>
    %467 = arith.mulf %466, %465 : vector<2x128xf32>
    %468 = arith.addf %463, %467 : vector<2x128xf32>
    %cst_32 = arith.constant 2.000000e-01 : f32
    %469 = vector.broadcast %cst_32 : f32 to vector<2x128xf32>
    %470 = arith.mulf %469, %433 : vector<2x128xf32>
    %471 = arith.mulf %454, %434 : vector<2x128xf32>
    %472 = arith.subf %433, %471 : vector<2x128xf32>
    %cst_33 = arith.constant 8.000000e-01 : f32
    %473 = vector.broadcast %cst_33 : f32 to vector<2x128xf32>
    %474 = arith.mulf %473, %472 : vector<2x128xf32>
    %475 = arith.addf %470, %474 : vector<2x128xf32>
    %c0_34 = arith.constant 0 : index
    %c0_35 = arith.constant 0 : index
    %476 = vector.load %arg7[%c0_34, %c0_35] : memref<2x2xf32, #tpu.memory_space<vmem>>, vector<2x2xf32>
    %477 = vector.extract_strided_slice %461 {offsets = [0, 0], sizes = [1, 128], strides = [1, 1]} : vector<2x128xf32> to vector<1x128xf32>
    %478 = vector.shape_cast %477 : vector<1x128xf32> to vector<1x128xf32>
    %479 = vector.broadcast %478 : vector<1x128xf32> to vector<2x128xf32>
    %480 = vector.extract_strided_slice %476 {offsets = [0, 0], sizes = [2, 1], strides = [1, 1]} : vector<2x2xf32> to vector<2x1xf32>
    %481 = vector.broadcast %480 : vector<2x1xf32> to vector<2x128xf32>
    %482 = arith.mulf %479, %481 : vector<2x128xf32>
    %483 = vector.extract_strided_slice %461 {offsets = [1, 0], sizes = [1, 128], strides = [1, 1]} : vector<2x128xf32> to vector<1x128xf32>
    %484 = vector.shape_cast %483 : vector<1x128xf32> to vector<1x128xf32>
    %485 = vector.broadcast %484 : vector<1x128xf32> to vector<2x128xf32>
    %486 = vector.extract_strided_slice %476 {offsets = [0, 1], sizes = [2, 1], strides = [1, 1]} : vector<2x2xf32> to vector<2x1xf32>
    %487 = vector.broadcast %486 : vector<2x1xf32> to vector<2x128xf32>
    %488 = arith.mulf %485, %487 : vector<2x128xf32>
    %489 = arith.addf %482, %488 : vector<2x128xf32>
    %490 = vector.extract_strided_slice %468 {offsets = [0, 0], sizes = [1, 128], strides = [1, 1]} : vector<2x128xf32> to vector<1x128xf32>
    %491 = vector.shape_cast %490 : vector<1x128xf32> to vector<1x128xf32>
    %492 = vector.broadcast %491 : vector<1x128xf32> to vector<2x128xf32>
    %493 = vector.extract_strided_slice %476 {offsets = [0, 0], sizes = [2, 1], strides = [1, 1]} : vector<2x2xf32> to vector<2x1xf32>
    %494 = vector.broadcast %493 : vector<2x1xf32> to vector<2x128xf32>
    %495 = arith.mulf %492, %494 : vector<2x128xf32>
    %496 = vector.extract_strided_slice %468 {offsets = [1, 0], sizes = [1, 128], strides = [1, 1]} : vector<2x128xf32> to vector<1x128xf32>
    %497 = vector.shape_cast %496 : vector<1x128xf32> to vector<1x128xf32>
    %498 = vector.broadcast %497 : vector<1x128xf32> to vector<2x128xf32>
    %499 = vector.extract_strided_slice %476 {offsets = [0, 1], sizes = [2, 1], strides = [1, 1]} : vector<2x2xf32> to vector<2x1xf32>
    %500 = vector.broadcast %499 : vector<2x1xf32> to vector<2x128xf32>
    %501 = arith.mulf %498, %500 : vector<2x128xf32>
    %502 = arith.addf %495, %501 : vector<2x128xf32>
    %503 = vector.extract_strided_slice %475 {offsets = [0, 0], sizes = [1, 128], strides = [1, 1]} : vector<2x128xf32> to vector<1x128xf32>
    %504 = vector.shape_cast %503 : vector<1x128xf32> to vector<1x128xf32>
    %505 = vector.broadcast %504 : vector<1x128xf32> to vector<2x128xf32>
    %506 = vector.extract_strided_slice %476 {offsets = [0, 0], sizes = [2, 1], strides = [1, 1]} : vector<2x2xf32> to vector<2x1xf32>
    %507 = vector.broadcast %506 : vector<2x1xf32> to vector<2x128xf32>
    %508 = arith.mulf %505, %507 : vector<2x128xf32>
    %509 = vector.extract_strided_slice %475 {offsets = [1, 0], sizes = [1, 128], strides = [1, 1]} : vector<2x128xf32> to vector<1x128xf32>
    %510 = vector.shape_cast %509 : vector<1x128xf32> to vector<1x128xf32>
    %511 = vector.broadcast %510 : vector<1x128xf32> to vector<2x128xf32>
    %512 = vector.extract_strided_slice %476 {offsets = [0, 1], sizes = [2, 1], strides = [1, 1]} : vector<2x2xf32> to vector<2x1xf32>
    %513 = vector.broadcast %512 : vector<2x1xf32> to vector<2x128xf32>
    %514 = arith.mulf %511, %513 : vector<2x128xf32>
    %515 = arith.addf %508, %514 : vector<2x128xf32>
    %516 = vector.extract_strided_slice %489 {offsets = [0, 0], sizes = [1, 128], strides = [1, 1]} : vector<2x128xf32> to vector<1x128xf32>
    %517 = vector.extract_strided_slice %502 {offsets = [0, 0], sizes = [1, 128], strides = [1, 1]} : vector<2x128xf32> to vector<1x128xf32>
    %518 = vector.extract_strided_slice %515 {offsets = [0, 0], sizes = [1, 128], strides = [1, 1]} : vector<2x128xf32> to vector<1x128xf32>
    %519 = vector.extract_strided_slice %489 {offsets = [1, 0], sizes = [1, 128], strides = [1, 1]} : vector<2x128xf32> to vector<1x128xf32>
    %520 = vector.extract_strided_slice %502 {offsets = [1, 0], sizes = [1, 128], strides = [1, 1]} : vector<2x128xf32> to vector<1x128xf32>
    %521 = vector.extract_strided_slice %515 {offsets = [1, 0], sizes = [1, 128], strides = [1, 1]} : vector<2x128xf32> to vector<1x128xf32>
    %522 = arith.mulf %516, %516 : vector<1x128xf32>
    %523 = arith.mulf %517, %517 : vector<1x128xf32>
    %524 = arith.addf %522, %523 : vector<1x128xf32>
    %525 = arith.mulf %518, %518 : vector<1x128xf32>
    %526 = arith.addf %524, %525 : vector<1x128xf32>
    %527 = math.sqrt %526 : vector<1x128xf32>
    %cst_36 = arith.constant 9.99999996E-13 : f32
    %528 = vector.broadcast %cst_36 : f32 to vector<1x128xf32>
    %529 = arith.addf %527, %528 : vector<1x128xf32>
    %cst_37 = arith.constant 1.000000e+00 : f32
    %530 = vector.broadcast %cst_37 : f32 to vector<1x128xf32>
    %531 = arith.divf %530, %529 : vector<1x128xf32>
    %532 = arith.mulf %516, %531 : vector<1x128xf32>
    %533 = arith.mulf %517, %531 : vector<1x128xf32>
    %534 = arith.mulf %518, %531 : vector<1x128xf32>
    %535 = arith.mulf %519, %532 : vector<1x128xf32>
    %536 = arith.mulf %520, %533 : vector<1x128xf32>
    %537 = arith.addf %535, %536 : vector<1x128xf32>
    %538 = arith.mulf %521, %534 : vector<1x128xf32>
    %539 = arith.addf %537, %538 : vector<1x128xf32>
    %540 = arith.mulf %539, %532 : vector<1x128xf32>
    %541 = arith.subf %519, %540 : vector<1x128xf32>
    %542 = arith.mulf %539, %533 : vector<1x128xf32>
    %543 = arith.subf %520, %542 : vector<1x128xf32>
    %544 = arith.mulf %539, %534 : vector<1x128xf32>
    %545 = arith.subf %521, %544 : vector<1x128xf32>
    %546 = arith.mulf %541, %541 : vector<1x128xf32>
    %547 = arith.mulf %543, %543 : vector<1x128xf32>
    %548 = arith.addf %546, %547 : vector<1x128xf32>
    %549 = arith.mulf %545, %545 : vector<1x128xf32>
    %550 = arith.addf %548, %549 : vector<1x128xf32>
    %551 = math.sqrt %550 : vector<1x128xf32>
    %cst_38 = arith.constant 9.99999996E-13 : f32
    %552 = vector.broadcast %cst_38 : f32 to vector<1x128xf32>
    %553 = arith.addf %551, %552 : vector<1x128xf32>
    %cst_39 = arith.constant 1.000000e+00 : f32
    %554 = vector.broadcast %cst_39 : f32 to vector<1x128xf32>
    %555 = arith.divf %554, %553 : vector<1x128xf32>
    %556 = arith.mulf %541, %555 : vector<1x128xf32>
    %557 = arith.mulf %543, %555 : vector<1x128xf32>
    %558 = arith.mulf %545, %555 : vector<1x128xf32>
    %559 = arith.mulf %533, %558 : vector<1x128xf32>
    %560 = arith.mulf %534, %557 : vector<1x128xf32>
    %561 = arith.subf %559, %560 : vector<1x128xf32>
    %562 = arith.mulf %534, %556 : vector<1x128xf32>
    %563 = arith.mulf %532, %558 : vector<1x128xf32>
    %564 = arith.subf %562, %563 : vector<1x128xf32>
    %565 = arith.mulf %532, %557 : vector<1x128xf32>
    %566 = arith.mulf %533, %556 : vector<1x128xf32>
    %567 = arith.subf %565, %566 : vector<1x128xf32>
    %c0_40 = arith.constant 0 : index
    %c0_41 = arith.constant 0 : index
    %c0_42 = arith.constant 0 : index
    %c0_43 = arith.constant 0 : index
    %568 = vector.load %arg9[%c0_40, %c0_41, %c0_42, %c0_43] : memref<1x3x3x128xf32, #tpu.memory_space<vmem>>, vector<1x1x1x128xf32>
    %569 = vector.shape_cast %568 : vector<1x1x1x128xf32> to vector<1x128xf32>
    %570 = vector.shape_cast %532 : vector<1x128xf32> to vector<1x1x1x128xf32>
    tpu.vector_store %arg9[%c0_40, %c0_41, %c0_42, %c0_43], %570 {strides = array<i32>} : memref<1x3x3x128xf32, #tpu.memory_space<vmem>>, vector<1x1x1x128xf32>,
    %c0_44 = arith.constant 0 : index
    %c0_45 = arith.constant 0 : index
    %c1_46 = arith.constant 1 : index
    %c0_47 = arith.constant 0 : index
    %571 = vector.load %arg9[%c0_44, %c0_45, %c1_46, %c0_47] : memref<1x3x3x128xf32, #tpu.memory_space<vmem>>, vector<1x1x1x128xf32>
    %572 = vector.shape_cast %571 : vector<1x1x1x128xf32> to vector<1x128xf32>
    %573 = vector.shape_cast %556 : vector<1x128xf32> to vector<1x1x1x128xf32>
    tpu.vector_store %arg9[%c0_44, %c0_45, %c1_46, %c0_47], %573 {strides = array<i32>} : memref<1x3x3x128xf32, #tpu.memory_space<vmem>>, vector<1x1x1x128xf32>,
    %c0_48 = arith.constant 0 : index
    %c0_49 = arith.constant 0 : index
    %c2_50 = arith.constant 2 : index
    %c0_51 = arith.constant 0 : index
    %574 = vector.load %arg9[%c0_48, %c0_49, %c2_50, %c0_51] : memref<1x3x3x128xf32, #tpu.memory_space<vmem>>, vector<1x1x1x128xf32>
    %575 = vector.shape_cast %574 : vector<1x1x1x128xf32> to vector<1x128xf32>
    %576 = vector.shape_cast %561 : vector<1x128xf32> to vector<1x1x1x128xf32>
    tpu.vector_store %arg9[%c0_48, %c0_49, %c2_50, %c0_51], %576 {strides = array<i32>} : memref<1x3x3x128xf32, #tpu.memory_space<vmem>>, vector<1x1x1x128xf32>,
    %c0_52 = arith.constant 0 : index
    %c1_53 = arith.constant 1 : index
    %c0_54 = arith.constant 0 : index
    %c0_55 = arith.constant 0 : index
    %577 = vector.load %arg9[%c0_52, %c1_53, %c0_54, %c0_55] : memref<1x3x3x128xf32, #tpu.memory_space<vmem>>, vector<1x1x1x128xf32>
    %578 = vector.shape_cast %577 : vector<1x1x1x128xf32> to vector<1x128xf32>
    %579 = vector.shape_cast %533 : vector<1x128xf32> to vector<1x1x1x128xf32>
    tpu.vector_store %arg9[%c0_52, %c1_53, %c0_54, %c0_55], %579 {strides = array<i32>} : memref<1x3x3x128xf32, #tpu.memory_space<vmem>>, vector<1x1x1x128xf32>,
    %c0_56 = arith.constant 0 : index
    %c1_57 = arith.constant 1 : index
    %c1_58 = arith.constant 1 : index
    %c0_59 = arith.constant 0 : index
    %580 = vector.load %arg9[%c0_56, %c1_57, %c1_58, %c0_59] : memref<1x3x3x128xf32, #tpu.memory_space<vmem>>, vector<1x1x1x128xf32>
    %581 = vector.shape_cast %580 : vector<1x1x1x128xf32> to vector<1x128xf32>
    %582 = vector.shape_cast %557 : vector<1x128xf32> to vector<1x1x1x128xf32>
    tpu.vector_store %arg9[%c0_56, %c1_57, %c1_58, %c0_59], %582 {strides = array<i32>} : memref<1x3x3x128xf32, #tpu.memory_space<vmem>>, vector<1x1x1x128xf32>,
    %c0_60 = arith.constant 0 : index
    %c1_61 = arith.constant 1 : index
    %c2_62 = arith.constant 2 : index
    %c0_63 = arith.constant 0 : index
    %583 = vector.load %arg9[%c0_60, %c1_61, %c2_62, %c0_63] : memref<1x3x3x128xf32, #tpu.memory_space<vmem>>, vector<1x1x1x128xf32>
    %584 = vector.shape_cast %583 : vector<1x1x1x128xf32> to vector<1x128xf32>
    %585 = vector.shape_cast %564 : vector<1x128xf32> to vector<1x1x1x128xf32>
    tpu.vector_store %arg9[%c0_60, %c1_61, %c2_62, %c0_63], %585 {strides = array<i32>} : memref<1x3x3x128xf32, #tpu.memory_space<vmem>>, vector<1x1x1x128xf32>,
    %c0_64 = arith.constant 0 : index
    %c2_65 = arith.constant 2 : index
    %c0_66 = arith.constant 0 : index
    %c0_67 = arith.constant 0 : index
    %586 = vector.load %arg9[%c0_64, %c2_65, %c0_66, %c0_67] : memref<1x3x3x128xf32, #tpu.memory_space<vmem>>, vector<1x1x1x128xf32>
    %587 = vector.shape_cast %586 : vector<1x1x1x128xf32> to vector<1x128xf32>
    %588 = vector.shape_cast %534 : vector<1x128xf32> to vector<1x1x1x128xf32>
    tpu.vector_store %arg9[%c0_64, %c2_65, %c0_66, %c0_67], %588 {strides = array<i32>} : memref<1x3x3x128xf32, #tpu.memory_space<vmem>>, vector<1x1x1x128xf32>,
    %c0_68 = arith.constant 0 : index
    %c2_69 = arith.constant 2 : index
    %c1_70 = arith.constant 1 : index
    %c0_71 = arith.constant 0 : index
    %589 = vector.load %arg9[%c0_68, %c2_69, %c1_70, %c0_71] : memref<1x3x3x128xf32, #tpu.memory_space<vmem>>, vector<1x1x1x128xf32>
    %590 = vector.shape_cast %589 : vector<1x1x1x128xf32> to vector<1x128xf32>
    %591 = vector.shape_cast %558 : vector<1x128xf32> to vector<1x1x1x128xf32>
    tpu.vector_store %arg9[%c0_68, %c2_69, %c1_70, %c0_71], %591 {strides = array<i32>} : memref<1x3x3x128xf32, #tpu.memory_space<vmem>>, vector<1x1x1x128xf32>,
    %c0_72 = arith.constant 0 : index
    %c2_73 = arith.constant 2 : index
    %c2_74 = arith.constant 2 : index
    %c0_75 = arith.constant 0 : index
    %592 = vector.load %arg9[%c0_72, %c2_73, %c2_74, %c0_75] : memref<1x3x3x128xf32, #tpu.memory_space<vmem>>, vector<1x1x1x128xf32>
    %593 = vector.shape_cast %592 : vector<1x1x1x128xf32> to vector<1x128xf32>
    %594 = vector.shape_cast %567 : vector<1x128xf32> to vector<1x1x1x128xf32>
    tpu.vector_store %arg9[%c0_72, %c2_73, %c2_74, %c0_75], %594 {strides = array<i32>} : memref<1x3x3x128xf32, #tpu.memory_space<vmem>>, vector<1x1x1x128xf32>,
    %595 = vector.shape_cast %532 : vector<1x128xf32> to vector<1x128xf32>
    %596 = vector.broadcast %595 : vector<1x128xf32> to vector<8x128xf32>
    %597 = arith.mulf %1, %596 : vector<8x128xf32>
    %598 = vector.shape_cast %533 : vector<1x128xf32> to vector<1x128xf32>
    %599 = vector.broadcast %598 : vector<1x128xf32> to vector<8x128xf32>
    %600 = arith.mulf %3, %599 : vector<8x128xf32>
    %601 = arith.addf %597, %600 : vector<8x128xf32>
    %602 = vector.shape_cast %534 : vector<1x128xf32> to vector<1x128xf32>
    %603 = vector.broadcast %602 : vector<1x128xf32> to vector<8x128xf32>
    %604 = arith.mulf %5, %603 : vector<8x128xf32>
    %605 = arith.addf %601, %604 : vector<8x128xf32>
    %c0_76 = arith.constant 0 : index
    %c0_77 = arith.constant 0 : index
    %c0_78 = arith.constant 0 : index
    %c0_79 = arith.constant 0 : index
    %606 = vector.load %arg8[%c0_76, %c0_77, %c0_78, %c0_79] : memref<1x3x8x128xf32, #tpu.memory_space<vmem>>, vector<1x1x8x128xf32>
    %607 = vector.shape_cast %606 : vector<1x1x8x128xf32> to vector<8x128xf32>
    %608 = vector.shape_cast %605 : vector<8x128xf32> to vector<1x1x8x128xf32>
    tpu.vector_store %arg8[%c0_76, %c0_77, %c0_78, %c0_79], %608 {strides = array<i32>} : memref<1x3x8x128xf32, #tpu.memory_space<vmem>>, vector<1x1x8x128xf32>,
    %609 = vector.shape_cast %556 : vector<1x128xf32> to vector<1x128xf32>
    %610 = vector.broadcast %609 : vector<1x128xf32> to vector<8x128xf32>
    %611 = arith.mulf %1, %610 : vector<8x128xf32>
    %612 = vector.shape_cast %557 : vector<1x128xf32> to vector<1x128xf32>
    %613 = vector.broadcast %612 : vector<1x128xf32> to vector<8x128xf32>
    %614 = arith.mulf %3, %613 : vector<8x128xf32>
    %615 = arith.addf %611, %614 : vector<8x128xf32>
    %616 = vector.shape_cast %558 : vector<1x128xf32> to vector<1x128xf32>
    %617 = vector.broadcast %616 : vector<1x128xf32> to vector<8x128xf32>
    %618 = arith.mulf %5, %617 : vector<8x128xf32>
    %619 = arith.addf %615, %618 : vector<8x128xf32>
    %c0_80 = arith.constant 0 : index
    %c1_81 = arith.constant 1 : index
    %c0_82 = arith.constant 0 : index
    %c0_83 = arith.constant 0 : index
    %620 = vector.load %arg8[%c0_80, %c1_81, %c0_82, %c0_83] : memref<1x3x8x128xf32, #tpu.memory_space<vmem>>, vector<1x1x8x128xf32>
    %621 = vector.shape_cast %620 : vector<1x1x8x128xf32> to vector<8x128xf32>
    %622 = vector.shape_cast %619 : vector<8x128xf32> to vector<1x1x8x128xf32>
    tpu.vector_store %arg8[%c0_80, %c1_81, %c0_82, %c0_83], %622 {strides = array<i32>} : memref<1x3x8x128xf32, #tpu.memory_space<vmem>>, vector<1x1x8x128xf32>,
    %623 = vector.shape_cast %561 : vector<1x128xf32> to vector<1x128xf32>
    %624 = vector.broadcast %623 : vector<1x128xf32> to vector<8x128xf32>
    %625 = arith.mulf %1, %624 : vector<8x128xf32>
    %626 = vector.shape_cast %564 : vector<1x128xf32> to vector<1x128xf32>
    %627 = vector.broadcast %626 : vector<1x128xf32> to vector<8x128xf32>
    %628 = arith.mulf %3, %627 : vector<8x128xf32>
    %629 = arith.addf %625, %628 : vector<8x128xf32>
    %630 = vector.shape_cast %567 : vector<1x128xf32> to vector<1x128xf32>
    %631 = vector.broadcast %630 : vector<1x128xf32> to vector<8x128xf32>
    %632 = arith.mulf %5, %631 : vector<8x128xf32>
    %633 = arith.addf %629, %632 : vector<8x128xf32>
    %c0_84 = arith.constant 0 : index
    %c2_85 = arith.constant 2 : index
    %c0_86 = arith.constant 0 : index
    %c0_87 = arith.constant 0 : index
    %634 = vector.load %arg8[%c0_84, %c2_85, %c0_86, %c0_87] : memref<1x3x8x128xf32, #tpu.memory_space<vmem>>, vector<1x1x8x128xf32>
    %635 = vector.shape_cast %634 : vector<1x1x8x128xf32> to vector<8x128xf32>
    %636 = vector.shape_cast %633 : vector<8x128xf32> to vector<1x1x8x128xf32>
    tpu.vector_store %arg8[%c0_84, %c2_85, %c0_86, %c0_87], %636 {strides = array<i32>} : memref<1x3x8x128xf32, #tpu.memory_space<vmem>>, vector<1x1x8x128xf32>,
    return
  }
  func.func @transform_0(%arg0: i32, %arg1: i32) -> (i32, i32, i32, i32) {
    %c0_i32 = arith.constant 0 : i32
    %c0_i32_0 = arith.constant 0 : i32
    %c0_i32_1 = arith.constant 0 : i32
    return %arg0, %c0_i32, %c0_i32_0, %arg1 : i32, i32, i32, i32
  }
  func.func @transform_1(%arg0: i32, %arg1: i32) -> (i32, i32) {
    %c0_i32 = arith.constant 0 : i32
    %c0_i32_0 = arith.constant 0 : i32
    %c0_i32_1 = arith.constant 0 : i32
    return %c0_i32, %c0_i32_0 : i32, i32
  }
  func.func @transform_2(%arg0: i32, %arg1: i32) -> (i32, i32) {
    %c0_i32 = arith.constant 0 : i32
    %c0_i32_0 = arith.constant 0 : i32
    %c0_i32_1 = arith.constant 0 : i32
    return %c0_i32, %c0_i32_0 : i32, i32
  }
  func.func @transform_3(%arg0: i32, %arg1: i32) -> (i32, i32) {
    %c0_i32 = arith.constant 0 : i32
    %c0_i32_0 = arith.constant 0 : i32
    %c0_i32_1 = arith.constant 0 : i32
    return %c0_i32, %c0_i32_0 : i32, i32
  }
  func.func @transform_4(%arg0: i32, %arg1: i32) -> (i32, i32) {
    %c0_i32 = arith.constant 0 : i32
    %c0_i32_0 = arith.constant 0 : i32
    %c0_i32_1 = arith.constant 0 : i32
    return %c0_i32, %c0_i32_0 : i32, i32
  }
  func.func @transform_5(%arg0: i32, %arg1: i32) -> (i32, i32) {
    %c0_i32 = arith.constant 0 : i32
    %c0_i32_0 = arith.constant 0 : i32
    %c0_i32_1 = arith.constant 0 : i32
    return %c0_i32, %c0_i32_0 : i32, i32
  }
  func.func @transform_6(%arg0: i32, %arg1: i32) -> (i32, i32, i32, i32) {
    %c0_i32 = arith.constant 0 : i32
    %c0_i32_0 = arith.constant 0 : i32
    %c0_i32_1 = arith.constant 0 : i32
    return %arg0, %c0_i32, %c0_i32_0, %arg1 : i32, i32, i32, i32
  }
  func.func @transform_7(%arg0: i32, %arg1: i32) -> (i32, i32, i32, i32) {
    %c0_i32 = arith.constant 0 : i32
    %c0_i32_0 = arith.constant 0 : i32
    %c0_i32_1 = arith.constant 0 : i32
    return %arg0, %c0_i32, %c0_i32_0, %arg1 : i32, i32, i32, i32
  }
}

</mosaic_0001>

<llo_original>
// kernel: tpu_custom_call.1
$region0: #{tpu_custom_call.1}
  #allocation0 [shape = 'u32[]', space=smem, size = 0x4, offset = 0x4, fixed_abs, tag = 'smem constant byte address 0x4 - core index']
  #allocation1 [shape = 'u32[144,128]{1,0:T(1,128)}', space=vmem, size = 0x12000, scoped, tag = 'internal scratch']
  %s0 = inlined_call_operand.hbm [shape: f32[2,3,8,128], index: 0, kind: input, shape index: {}]
  %s1 = inlined_call_operand.hbm [shape: f32[4,8], index: 1, kind: input, shape index: {}]
  %s2 = inlined_call_operand.vmem [shape: f32[4,8], index: 2, kind: input, shape index: {}]
  %s3 = inlined_call_operand.vmem [shape: f32[2,4], index: 3, kind: input, shape index: {}]
  %s4 = inlined_call_operand.vmem [shape: f32[2,4], index: 4, kind: input, shape index: {}]
  %s5 = inlined_call_operand.vmem [shape: f32[2,2], index: 5, kind: input, shape index: {}]
  %s6 = inlined_call_operand.hbm [shape: f32[2,3,8,128], index: 6, kind: output, shape index: {0}]
  %s7 = inlined_call_operand.vmem [shape: f32[2,3,3,128], index: 7, kind: output, shape index: {1}]
  %8 = xla_tuple %s6, %s7
  %s9 = sld [smem:[#allocation0]]
  $region73: #{tpu_custom_call.1} parent=0
    _
  %s11 = ssub.s32 1, %s9
  %s12 = scalar_select 0, %s11, %s9
  $region1: #{tpu_custom_call.1} parent=0
    #allocation2 [shape = 'u8[24576]{0}', space=vmem, size = 0x6000, scoped, tag = 'input window, operand 0']
    #allocation3 [shape = 's32[2]{0}', space=sflag, size = 0x8, scoped, tag = 'scoped memory for tpu_custom_call.1']
    #allocation4 [shape = 's32[2]{0}', space=sflag, size = 0x8, scoped, tag = 'scoped memory for tpu_custom_call.1']
    #allocation5 [shape = 'u8[2048]{0}', space=vmem, size = 0x800, scoped, tag = 'input window, operand 1, single buffered']
    #allocation6 [shape = 's32[1]{0}', space=sflag, size = 0x4, scoped, tag = 'scoped memory for tpu_custom_call.1']
    #allocation7 [shape = 'u8[24576]{0}', space=vmem, size = 0x6000, scoped, tag = 'output window, operand 0']
    %13 = vsyncpa [#allocation3], 0
    %s14 = scalar_lea.sflag [#allocation3], 1
    %15 = vsyncpa %s14, 0
    %16 = vsyncpa [#allocation6], 0
    %17 = vsyncpa [#allocation4], 0
    %s18 = scalar_lea.sflag [#allocation4], 1
    %19 = vsyncpa %s18, 0
    loop: start=0, step=1, limit=4
    $region2: #{tpu_custom_call.1} parent=1 // loop_pre_header
      _
    $region3: #{tpu_custom_call.1} parent=1 // loop_header
      %s21 = sphi 0, %s25
      %p22 = scmp.ge.s32.totalorder %s21, 4
      %s28 = sphi 0, %s40
      %s29 = sphi 0, %s36
      %s30 = sphi 0, %s28
      %s31 = sphi 0, %s29
      %s32 = sphi 0, %s30
      %s33 = sphi 0, %s31
      %s45 = sphi 0, %s47
      %s48 = sphi 0, %s45
      %s49 = sphi 0, %s48
      %s65 = sphi 0, %s49
      %s69 = sphi 0, %s69
      %s71 = sphi 0, %s69
      %s72 = sphi 0, %s71
      %s86 = sphi 0, %s72
      %s90 = sphi 0, %s90
      %s92 = sphi 0, %s90
      %s93 = sphi 0, %s92
      %s107 = sphi 0, %s93
      %s111 = sphi 0, %s111
      %s113 = sphi 0, %s111
      %s114 = sphi 0, %s113
      %s128 = sphi 0, %s114
      %s132 = sphi 0, %s132
      %s134 = sphi 0, %s132
      %s135 = sphi 0, %s134
      %s149 = sphi 0, %s135
      %s153 = sphi 0, %s153
      %s155 = sphi 0, %s153
      %s156 = sphi 0, %s155
      %s170 = sphi 0, %s156
      %s178 = sphi 0, %s180
      %s181 = sphi 0, %s178
      %s182 = sphi 0, %s181
      %s198 = sphi 0, %s182
      %s206 = sphi 0, %s208
      %s209 = sphi 0, %s206
      %s210 = sphi 0, %s209
      %s226 = sphi 0, %s210
    $region4: #{tpu_custom_call.1} parent=1 // loop_header_branch
      %24 = sbr.rel (%p22) target = $region8
    $region5: #{tpu_custom_call.1} parent=1 // loop_body
      %s26 = ssub.s32 %s21, 1
      %s27 = ssub.s32 %s21, 2
      %s34 = sadd.s32 1, %s29
      %p35 = scmp.ge.s32.totalorder %s34, 1
      %s36 = scalar_select %p35, 0, %s34
      %s37 = sadd.s32 1, %s28
      %s38 = scalar_select %p35, %s37, %s28
      %p39 = scmp.ge.s32.totalorder %s38, 2
      %s40 = scalar_select %p39, 0, %s38
      %s41 = ssub.s32 %s28, %s40
      %s42 = ssub.s32 %s29, %s36
      %s43 = sor.u32 %s41, %s42
      %p44 = scmp.eq.s32.totalorder %s43, 0
      %s46 = sadd.s32 %s45, 1
      %s47 = scalar_select %p44, %s45, %s46
      %p50 = pneg %p44
      %p51 = scmp.eq.s32.totalorder %s21, 1
      %p52 = por %p50, %p51
      %p53 = scmp.ne.s32.totalorder %s45, %s48
      %p54 = scmp.eq.s32.totalorder %s21, 0
      %p55 = por %p53, %p54
      %p56 = scmp.ne.s32.totalorder %s45, %s48
      %p57 = scmp.eq.s32.totalorder %s26, 1
      %p58 = por %p56, %p57
      %p59 = scmp.ne.s32.totalorder %s48, %s49
      %p60 = scmp.eq.s32.totalorder %s26, 0
      %p61 = por %p59, %p60
      %p62 = scmp.ne.s32.totalorder %s48, %s49
      %p63 = scmp.eq.s32.totalorder %s27, 1
      %p64 = por %p62, %p63
      %p66 = scmp.ne.s32.totalorder %s49, %s65
      %p67 = scmp.eq.s32.totalorder %s27, 0
      %p68 = por %p66, %p67
      %s70 = sadd.s32 %s69, 1
      %p73 = scmp.eq.s32.totalorder %s21, 1
      %p74 = scmp.ne.s32.totalorder %s69, %s71
      %p75 = scmp.eq.s32.totalorder %s21, 0
      %p76 = por %p74, %p75
      %p77 = scmp.ne.s32.totalorder %s69, %s71
      %p78 = scmp.eq.s32.totalorder %s26, 1
      %p79 = por %p77, %p78
      %p80 = scmp.ne.s32.totalorder %s71, %s72
      %p81 = scmp.eq.s32.totalorder %s26, 0
      %p82 = por %p80, %p81
      %p83 = scmp.ne.s32.totalorder %s71, %s72
      %p84 = scmp.eq.s32.totalorder %s27, 1
      %p85 = por %p83, %p84
      %p87 = scmp.ne.s32.totalorder %s72, %s86
      %p88 = scmp.eq.s32.totalorder %s27, 0
      %p89 = por %p87, %p88
      %s91 = sadd.s32 %s90, 1
      %p94 = scmp.eq.s32.totalorder %s21, 1
      %p95 = scmp.ne.s32.totalorder %s90, %s92
      %p96 = scmp.eq.s32.totalorder %s21, 0
      %p97 = por %p95, %p96
      %p98 = scmp.ne.s32.totalorder %s90, %s92
      %p99 = scmp.eq.s32.totalorder %s26, 1
      %p100 = por %p98, %p99
      %p101 = scmp.ne.s32.totalorder %s92, %s93
      %p102 = scmp.eq.s32.totalorder %s26, 0
      %p103 = por %p101, %p102
      %p104 = scmp.ne.s32.totalorder %s92, %s93
      %p105 = scmp.eq.s32.totalorder %s27, 1
      %p106 = por %p104, %p105
      %p108 = scmp.ne.s32.totalorder %s93, %s107
      %p109 = scmp.eq.s32.totalorder %s27, 0
      %p110 = por %p108, %p109
      %s112 = sadd.s32 %s111, 1
      %p115 = scmp.eq.s32.totalorder %s21, 1
      %p116 = scmp.ne.s32.totalorder %s111, %s113
      %p117 = scmp.eq.s32.totalorder %s21, 0
      %p118 = por %p116, %p117
      %p119 = scmp.ne.s32.totalorder %s111, %s113
      %p120 = scmp.eq.s32.totalorder %s26, 1
      %p121 = por %p119, %p120
      %p122 = scmp.ne.s32.totalorder %s113, %s114
      %p123 = scmp.eq.s32.totalorder %s26, 0
      %p124 = por %p122, %p123
      %p125 = scmp.ne.s32.totalorder %s113, %s114
      %p126 = scmp.eq.s32.totalorder %s27, 1
      %p127 = por %p125, %p126
      %p129 = scmp.ne.s32.totalorder %s114, %s128
      %p130 = scmp.eq.s32.totalorder %s27, 0
      %p131 = por %p129, %p130
      %s133 = sadd.s32 %s132, 1
      %p136 = scmp.eq.s32.totalorder %s21, 1
      %p137 = scmp.ne.s32.totalorder %s132, %s134
      %p138 = scmp.eq.s32.totalorder %s21, 0
      %p139 = por %p137, %p138
      %p140 = scmp.ne.s32.totalorder %s132, %s134
      %p141 = scmp.eq.s32.totalorder %s26, 1
      %p142 = por %p140, %p141
      %p143 = scmp.ne.s32.totalorder %s134, %s135
      %p144 = scmp.eq.s32.totalorder %s26, 0
      %p145 = por %p143, %p144
      %p146 = scmp.ne.s32.totalorder %s134, %s135
      %p147 = scmp.eq.s32.totalorder %s27, 1
      %p148 = por %p146, %p147
      %p150 = scmp.ne.s32.totalorder %s135, %s149
      %p151 = scmp.eq.s32.totalorder %s27, 0
      %p152 = por %p150, %p151
      %s154 = sadd.s32 %s153, 1
      %p157 = scmp.eq.s32.totalorder %s21, 1
      %p158 = scmp.ne.s32.totalorder %s153, %s155
      %p159 = scmp.eq.s32.totalorder %s21, 0
      %p160 = por %p158, %p159
      %p161 = scmp.ne.s32.totalorder %s153, %s155
      %p162 = scmp.eq.s32.totalorder %s26, 1
      %p163 = por %p161, %p162
      %p164 = scmp.ne.s32.totalorder %s155, %s156
      %p165 = scmp.eq.s32.totalorder %s26, 0
      %p166 = por %p164, %p165
      %p167 = scmp.ne.s32.totalorder %s155, %s156
      %p168 = scmp.eq.s32.totalorder %s27, 1
      %p169 = por %p167, %p168
      %p171 = scmp.ne.s32.totalorder %s156, %s170
      %p172 = scmp.eq.s32.totalorder %s27, 0
      %p173 = por %p171, %p172
      %s174 = ssub.s32 %s28, %s40
      %s175 = ssub.s32 %s29, %s36
      %s176 = sor.u32 %s174, %s175
      %p177 = scmp.eq.s32.totalorder %s176, 0
      %s179 = sadd.s32 %s178, 1
      %s180 = scalar_select %p177, %s178, %s179
      %p183 = pneg %p177
      %p184 = scmp.eq.s32.totalorder %s21, 1
      %p185 = por %p183, %p184
      %p186 = scmp.ne.s32.totalorder %s178, %s181
      %p187 = scmp.eq.s32.totalorder %s21, 0
      %p188 = por %p186, %p187
      %p189 = scmp.ne.s32.totalorder %s178, %s181
      %p190 = scmp.eq.s32.totalorder %s26, 1
      %p191 = por %p189, %p190
      %p192 = scmp.ne.s32.totalorder %s181, %s182
      %p193 = scmp.eq.s32.totalorder %s26, 0
      %p194 = por %p192, %p193
      %p195 = scmp.ne.s32.totalorder %s181, %s182
      %p196 = scmp.eq.s32.totalorder %s27, 1
      %p197 = por %p195, %p196
      %p199 = scmp.ne.s32.totalorder %s182, %s198
      %p200 = scmp.eq.s32.totalorder %s27, 0
      %p201 = por %p199, %p200
      %s202 = ssub.s32 %s28, %s40
      %s203 = ssub.s32 %s29, %s36
      %s204 = sor.u32 %s202, %s203
      %p205 = scmp.eq.s32.totalorder %s204, 0
      %s207 = sadd.s32 %s206, 1
      %s208 = scalar_select %p205, %s206, %s207
      %p211 = pneg %p205
      %p212 = scmp.eq.s32.totalorder %s21, 1
      %p213 = por %p211, %p212
      %p214 = scmp.ne.s32.totalorder %s206, %s209
      %p215 = scmp.eq.s32.totalorder %s21, 0
      %p216 = por %p214, %p215
      %p217 = scmp.ne.s32.totalorder %s206, %s209
      %p218 = scmp.eq.s32.totalorder %s26, 1
      %p219 = por %p217, %p218
      %p220 = scmp.ne.s32.totalorder %s209, %s210
      %p221 = scmp.eq.s32.totalorder %s26, 0
      %p222 = por %p220, %p221
      %p223 = scmp.ne.s32.totalorder %s209, %s210
      %p224 = scmp.eq.s32.totalorder %s27, 1
      %p225 = por %p223, %p224
      %p227 = scmp.ne.s32.totalorder %s210, %s226
      %p228 = scmp.eq.s32.totalorder %s27, 0
      %p229 = por %p227, %p228
      %p230 = scmp.le.s32.totalorder 1, %s21
      %p231 = scmp.lt.s32.totalorder %s21, 3
      %p232 = pnand %p230, %p231
      %p233 = pneg %p232
      // Predicated region
      $region9: #{tpu_custom_call.1} parent=5 // pred_check
        _
      $region10: #{tpu_custom_call.1} parent=5 // pred_check_branch
        %235 = sbr.rel (%p232) target = $region12
      $region11: #{tpu_custom_call.1} parent=5 // pred_region
        %s236 = ssub.s32 %s21, 1
        // Predicated region
        $region13: #{tpu_custom_call.1} parent=11 // pred_check
          %p237 = pneg %p82
        $region14: #{tpu_custom_call.1} parent=11 // pred_check_branch
          %239 = sbr.rel (%p237) target = $region16
        $region15: #{tpu_custom_call.1} parent=11 // pred_region
          %s241 = ssub.s32 64, 64
          %242 = vsyncadd [#allocation6], %s241
          %s244 = sshll.u32 [#allocation5], 4
          %s245 = int_to_ptr.vmem [resolvable:$true] %s244
          %247 = dma.hbm_to_vmem [thread:$0]  %s1, 64, %s245, [#allocation6]
        $region16: #{tpu_custom_call.1} parent=11 // pred_fallthru
          _
        // Predicated region
        $region17: #{tpu_custom_call.1} parent=11 // pred_check
          %p248 = pneg %p103
        $region18: #{tpu_custom_call.1} parent=11 // pred_check_branch
          %250 = sbr.rel (%p248) target = $region20
        $region19: #{tpu_custom_call.1} parent=11 // pred_region
          _
        $region20: #{tpu_custom_call.1} parent=11 // pred_fallthru
          _
        // Predicated region
        $region21: #{tpu_custom_call.1} parent=11 // pred_check
          %p251 = pneg %p124
        $region22: #{tpu_custom_call.1} parent=11 // pred_check_branch
          %253 = sbr.rel (%p251) target = $region24
        $region23: #{tpu_custom_call.1} parent=11 // pred_region
          _
        $region24: #{tpu_custom_call.1} parent=11 // pred_fallthru
          _
        // Predicated region
        $region25: #{tpu_custom_call.1} parent=11 // pred_check
          %p254 = pneg %p145
        $region26: #{tpu_custom_call.1} parent=11 // pred_check_branch
          %256 = sbr.rel (%p254) target = $region28
        $region27: #{tpu_custom_call.1} parent=11 // pred_region
          _
        $region28: #{tpu_custom_call.1} parent=11 // pred_fallthru
          _
        // Predicated region
        $region29: #{tpu_custom_call.1} parent=11 // pred_check
          %p257 = pneg %p166
        $region30: #{tpu_custom_call.1} parent=11 // pred_check_branch
          %259 = sbr.rel (%p257) target = $region32
        $region31: #{tpu_custom_call.1} parent=11 // pred_region
          _
        $region32: #{tpu_custom_call.1} parent=11 // pred_fallthru
          _
      $region12: #{tpu_custom_call.1} parent=5 // pred_fallthru
        _
      %p260 = scmp.lt.s32.totalorder %s21, 2
      // Predicated region
      $region33: #{tpu_custom_call.1} parent=5 // pred_check
        %p261 = pneg %p260
      $region34: #{tpu_custom_call.1} parent=5 // pred_check_branch
        %263 = sbr.rel (%p261) target = $region36
      $region35: #{tpu_custom_call.1} parent=5 // pred_region
        // Predicated region
        $region37: #{tpu_custom_call.1} parent=35 // pred_check
          %p264 = pneg %p55
        $region38: #{tpu_custom_call.1} parent=35 // pred_check_branch
          %266 = sbr.rel (%p264) target = $region40
        $region39: #{tpu_custom_call.1} parent=35 // pred_region
          %s267 = sand.u32 %s45, 1
          %s268 = scalar_lea.sflag [#allocation3], %s267
          %s269 = sand.u32 %s45, 1
          %s270 = smul.addr %s269, 24
          %s271 = scalar_lea.vmem [#allocation2], %s270
          %s273 = ssub.s32 384, 384
          %274 = vsyncadd %s268, %s273
          %s275 = smul.addr %s28, 3
          %s276 = sadd.s32 %s29, %s275
          %s277 = smul.addr %s276, 128
          %s278 = scalar_lea.hbm %s0, %s277
          %s279 = sshll.u32 %s271, 4
          %s280 = int_to_ptr.vmem [resolvable:$true] %s279
          %285 = dma.hbm_to_vmem [thread:$0]  %s278, 384, %s280, %s268, 128, 128, 8
        $region40: #{tpu_custom_call.1} parent=35 // pred_fallthru
          _
      $region36: #{tpu_custom_call.1} parent=5 // pred_fallthru
        _
      %p286 = scmp.le.s32.totalorder 1, %s21
      %p287 = scmp.lt.s32.totalorder %s21, 3
      %p288 = pnand %p286, %p287
      %p289 = pneg %p288
      // Predicated region
      $region41: #{tpu_custom_call.1} parent=5 // pred_check
        _
      $region42: #{tpu_custom_call.1} parent=5 // pred_check_branch
        %291 = sbr.rel (%p288) target = $region44
      $region43: #{tpu_custom_call.1} parent=5 // pred_region
        %s292 = ssub.s32 %s21, 1
        %s293 = sand.u32 %s48, 1
        %s294 = scalar_lea.sflag [#allocation3], %s293
        %s295 = sand.u32 %s48, 1
        %s296 = smul.addr %s295, 24
        %s297 = scalar_lea.vmem [#allocation2], %s296
        // Predicated region
        $region45: #{tpu_custom_call.1} parent=43 // pred_check
          %p298 = pneg %p61
        $region46: #{tpu_custom_call.1} parent=43 // pred_check_branch
          %300 = sbr.rel (%p298) target = $region48
        $region47: #{tpu_custom_call.1} parent=43 // pred_region
          %301 = dma.done %s294, 384
        $region48: #{tpu_custom_call.1} parent=43 // pred_fallthru
          _
        // Predicated region
        $region49: #{tpu_custom_call.1} parent=43 // pred_check
          %p302 = pneg %p82
        $region50: #{tpu_custom_call.1} parent=43 // pred_check_branch
          %304 = sbr.rel (%p302) target = $region52
        $region51: #{tpu_custom_call.1} parent=43 // pred_region
          %305 = dma.done [#allocation6], 64
        $region52: #{tpu_custom_call.1} parent=43 // pred_fallthru
          _
        %s306 = sand.u32 %s48, 1
        %s307 = scalar_lea.sflag [#allocation3], %s306
        %s308 = sand.u32 %s48, 1
        %s309 = smul.addr %s308, 24
        %s310 = scalar_lea.vmem [#allocation2], %s309
        %p311 = pneg %p61
        %p312 = pneg %p58
        %p313 = pneg %p82
        %p314 = pneg %p79
        %p315 = pneg %p103
        %p316 = pneg %p100
        %p317 = pneg %p124
        %p318 = pneg %p121
        %p319 = pneg %p145
        %p320 = pneg %p142
        %p321 = pneg %p166
        %p322 = pneg %p163
        %p323 = pneg %p194
        %p324 = pneg %p191
        %s325 = sand.u32 %s181, 1
        %s326 = scalar_lea.sflag [#allocation4], %s325
        %s327 = sand.u32 %s181, 1
        %s328 = smul.addr %s327, 24
        %s329 = scalar_lea.vmem [#allocation7], %s328
        %p330 = pneg %p222
        %p331 = pneg %p219
        %p332 = scmp.lt.s32.totalorder %s30, 1
        %s333 = scalar_select %p332, %s30, 1
        %p334 = scmp.lt.s32.totalorder %s31, 0
        %s335 = scalar_select %p334, %s31, 0
        %s336 = smul.addr %s333, 3
        %s337 = sadd.s32 %s335, %s336
        %s338 = smul.addr %s337, 4
        %s339 = scalar_lea.vmem %s7, %s338
        %p340 = scmp.lt.s32.totalorder %s30, 1
        %s341 = scalar_select %p340, %s30, 1
        %p342 = scmp.lt.s32.totalorder %s31, 0
        %s343 = scalar_select %p342, %s31, 0
        %s344 = smul.addr %s341, 3
        %s345 = sadd.s32 %s343, %s344
        %s346 = smul.addr %s345, 4
        %s347 = scalar_lea.vmem %s7, %s346
        %v348 = vld [vmem:[%s297] sm:$0xff]
        %s349 = scalar_lea.vmem %s297, 8 [#allocation2]
        %v350 = vld [vmem:[%s349] sm:$0xff]
        %s351 = scalar_lea.vmem %s297, 16 [#allocation2]
        %v352 = vld [vmem:[%s351] sm:$0xff]
        %v353 = vld [vmem:[#allocation5] sm:$0xf]
        %v354 = vld [vmem:[%s2] sm:$0xf]
        %v355 = vlaneseq
        %v356 = vshrl.u32 %v355, 7
        %v357 = vsub.s32 0, %v356
        %v358 = vrot.slane %v348, %v357
        %360 = vset.pattern.permute.xlu0 0
        %361 = vperm.xlu0 %360, %v353
        %v362 = vpop.permute.xlu0 %361
        %v364 = vmul.f32 %v358, %v362
        %366 = vset.pattern.permute.xlu0 0
        %367 = vperm.xlu0 %366, %v354
        %v368 = vpop.permute.xlu0 %367
        %v370 = vmul.f32 %v358, %v368
        %v371 = vlaneseq
        %v372 = vshrl.u32 %v371, 7
        %v373 = vsub.s32 1, %v372
        %v374 = vrot.slane %v348, %v373
        %375 = vset.pattern.permute.xlu0 1
        %376 = vperm.xlu0 %375, %v353
        %v377 = vpop.permute.xlu0 %376
        %v379 = vmul.f32 %v374, %v377
        %380 = vset.pattern.permute.xlu0 1
        %381 = vperm.xlu0 %380, %v354
        %v382 = vpop.permute.xlu0 %381
        %v384 = vmul.f32 %v374, %v382
        %v385 = vadd.f32 %v364, %v379
        %v386 = vadd.f32 %v370, %v384
        %v387 = vlaneseq
        %v388 = vshrl.u32 %v387, 7
        %v389 = vsub.s32 2, %v388
        %v390 = vrot.slane %v348, %v389
        %391 = vset.pattern.permute.xlu0 2
        %392 = vperm.xlu0 %391, %v353
        %v393 = vpop.permute.xlu0 %392
        %v395 = vmul.f32 %v390, %v393
        %396 = vset.pattern.permute.xlu0 2
        %397 = vperm.xlu0 %396, %v354
        %v398 = vpop.permute.xlu0 %397
        %v400 = vmul.f32 %v390, %v398
        %v401 = vadd.f32 %v385, %v395
        %v402 = vadd.f32 %v386, %v400
        %v403 = vlaneseq
        %v404 = vshrl.u32 %v403, 7
        %v405 = vsub.s32 3, %v404
        %v406 = vrot.slane %v348, %v405
        %407 = vset.pattern.permute.xlu0 3
        %408 = vperm.xlu0 %407, %v353
        %v409 = vpop.permute.xlu0 %408
        %v411 = vmul.f32 %v406, %v409
        %412 = vset.pattern.permute.xlu0 3
        %413 = vperm.xlu0 %412, %v354
        %v414 = vpop.permute.xlu0 %413
        %v416 = vmul.f32 %v406, %v414
        %v417 = vadd.f32 %v401, %v411
        %v418 = vadd.f32 %v402, %v416
        %v419 = vlaneseq
        %v420 = vshrl.u32 %v419, 7
        %v421 = vsub.s32 4, %v420
        %v422 = vrot.slane %v348, %v421
        %423 = vset.pattern.permute.xlu0 4
        %424 = vperm.xlu0 %423, %v353
        %v425 = vpop.permute.xlu0 %424
        %v427 = vmul.f32 %v422, %v425
        %428 = vset.pattern.permute.xlu0 4
        %429 = vperm.xlu0 %428, %v354
        %v430 = vpop.permute.xlu0 %429
        %v432 = vmul.f32 %v422, %v430
        %v433 = vadd.f32 %v417, %v427
        %v434 = vadd.f32 %v418, %v432
        %v435 = vlaneseq
        %v436 = vshrl.u32 %v435, 7
        %v437 = vsub.s32 5, %v436
        %v438 = vrot.slane %v348, %v437
        %439 = vset.pattern.permute.xlu0 5
        %440 = vperm.xlu0 %439, %v353
        %v441 = vpop.permute.xlu0 %440
        %v443 = vmul.f32 %v438, %v441
        %444 = vset.pattern.permute.xlu0 5
        %445 = vperm.xlu0 %444, %v354
        %v446 = vpop.permute.xlu0 %445
        %v448 = vmul.f32 %v438, %v446
        %v449 = vadd.f32 %v433, %v443
        %v450 = vadd.f32 %v434, %v448
        %v451 = vlaneseq
        %v452 = vshrl.u32 %v451, 7
        %v453 = vsub.s32 6, %v452
        %v454 = vrot.slane %v348, %v453
        %455 = vset.pattern.permute.xlu0 6
        %456 = vperm.xlu0 %455, %v353
        %v457 = vpop.permute.xlu0 %456
        %v459 = vmul.f32 %v454, %v457
        %460 = vset.pattern.permute.xlu0 6
        %461 = vperm.xlu0 %460, %v354
        %v462 = vpop.permute.xlu0 %461
        %v464 = vmul.f32 %v454, %v462
        %v465 = vadd.f32 %v449, %v459
        %v466 = vadd.f32 %v450, %v464
        %v467 = vlaneseq
        %v468 = vshrl.u32 %v467, 7
        %v469 = vsub.s32 7, %v468
        %v470 = vrot.slane %v348, %v469
        %471 = vset.pattern.permute.xlu0 7
        %472 = vperm.xlu0 %471, %v353
        %v473 = vpop.permute.xlu0 %472
        %v475 = vmul.f32 %v470, %v473
        %476 = vset.pattern.permute.xlu0 7
        %477 = vperm.xlu0 %476, %v354
        %v478 = vpop.permute.xlu0 %477
        %v480 = vmul.f32 %v470, %v478
        %v481 = vadd.f32 %v465, %v475
        %v482 = vadd.f32 %v466, %v480
        %v483 = vlaneseq
        %v484 = vshrl.u32 %v483, 7
        %v485 = vsub.s32 0, %v484
        %v486 = vrot.slane %v350, %v485
        %v487 = vmul.f32 %v486, %v362
        %v488 = vmul.f32 %v486, %v368
        %v489 = vlaneseq
        %v490 = vshrl.u32 %v489, 7
        %v491 = vsub.s32 1, %v490
        %v492 = vrot.slane %v350, %v491
        %v493 = vmul.f32 %v492, %v377
        %v494 = vmul.f32 %v492, %v382
        %v495 = vadd.f32 %v487, %v493
        %v496 = vadd.f32 %v488, %v494
        %v497 = vlaneseq
        %v498 = vshrl.u32 %v497, 7
        %v499 = vsub.s32 2, %v498
        %v500 = vrot.slane %v350, %v499
        %v501 = vmul.f32 %v500, %v393
        %v502 = vmul.f32 %v500, %v398
        %v503 = vadd.f32 %v495, %v501
        %v504 = vadd.f32 %v496, %v502
        %v505 = vlaneseq
        %v506 = vshrl.u32 %v505, 7
        %v507 = vsub.s32 3, %v506
        %v508 = vrot.slane %v350, %v507
        %v509 = vmul.f32 %v508, %v409
        %v510 = vmul.f32 %v508, %v414
        %v511 = vadd.f32 %v503, %v509
        %v512 = vadd.f32 %v504, %v510
        %v513 = vlaneseq
        %v514 = vshrl.u32 %v513, 7
        %v515 = vsub.s32 4, %v514
        %v516 = vrot.slane %v350, %v515
        %v517 = vmul.f32 %v516, %v425
        %v518 = vmul.f32 %v516, %v430
        %v519 = vadd.f32 %v511, %v517
        %v520 = vadd.f32 %v512, %v518
        %v521 = vlaneseq
        %v522 = vshrl.u32 %v521, 7
        %v523 = vsub.s32 5, %v522
        %v524 = vrot.slane %v350, %v523
        %v525 = vmul.f32 %v524, %v441
        %v526 = vmul.f32 %v524, %v446
        %v527 = vadd.f32 %v519, %v525
        %v528 = vadd.f32 %v520, %v526
        %v529 = vlaneseq
        %v530 = vshrl.u32 %v529, 7
        %v531 = vsub.s32 6, %v530
        %v532 = vrot.slane %v350, %v531
        %v533 = vmul.f32 %v532, %v457
        %v534 = vmul.f32 %v532, %v462
        %v535 = vadd.f32 %v527, %v533
        %v536 = vadd.f32 %v528, %v534
        %v537 = vlaneseq
        %v538 = vshrl.u32 %v537, 7
        %v539 = vsub.s32 7, %v538
        %v540 = vrot.slane %v350, %v539
        %v541 = vmul.f32 %v540, %v473
        %v542 = vmul.f32 %v540, %v478
        %v543 = vadd.f32 %v535, %v541
        %v544 = vadd.f32 %v536, %v542
        %v545 = vlaneseq
        %v546 = vshrl.u32 %v545, 7
        %v547 = vsub.s32 0, %v546
        %v548 = vrot.slane %v352, %v547
        %v549 = vmul.f32 %v548, %v362
        %v550 = vmul.f32 %v548, %v368
        %v551 = vlaneseq
        %v552 = vshrl.u32 %v551, 7
        %v553 = vsub.s32 1, %v552
        %v554 = vrot.slane %v352, %v553
        %v555 = vmul.f32 %v554, %v377
        %v556 = vmul.f32 %v554, %v382
        %v557 = vadd.f32 %v549, %v555
        %v558 = vadd.f32 %v550, %v556
        %v559 = vlaneseq
        %v560 = vshrl.u32 %v559, 7
        %v561 = vsub.s32 2, %v560
        %v562 = vrot.slane %v352, %v561
        %v563 = vmul.f32 %v562, %v393
        %v564 = vmul.f32 %v562, %v398
        %v565 = vadd.f32 %v557, %v563
        %v566 = vadd.f32 %v558, %v564
        %v567 = vlaneseq
        %v568 = vshrl.u32 %v567, 7
        %v569 = vsub.s32 3, %v568
        %v570 = vrot.slane %v352, %v569
        %v571 = vmul.f32 %v570, %v409
        %v572 = vmul.f32 %v570, %v414
        %v573 = vadd.f32 %v565, %v571
        %v574 = vadd.f32 %v566, %v572
        %v575 = vlaneseq
        %v576 = vshrl.u32 %v575, 7
        %v577 = vsub.s32 4, %v576
        %v578 = vrot.slane %v352, %v577
        %v579 = vmul.f32 %v578, %v425
        %v580 = vmul.f32 %v578, %v430
        %v581 = vadd.f32 %v573, %v579
        %v582 = vadd.f32 %v574, %v580
        %v583 = vlaneseq
        %v584 = vshrl.u32 %v583, 7
        %v585 = vsub.s32 5, %v584
        %v586 = vrot.slane %v352, %v585
        %v587 = vmul.f32 %v586, %v441
        %v588 = vmul.f32 %v586, %v446
        %v589 = vadd.f32 %v581, %v587
        %v590 = vadd.f32 %v582, %v588
        %v591 = vlaneseq
        %v592 = vshrl.u32 %v591, 7
        %v593 = vsub.s32 6, %v592
        %v594 = vrot.slane %v352, %v593
        %v595 = vmul.f32 %v594, %v457
        %v596 = vmul.f32 %v594, %v462
        %v597 = vadd.f32 %v589, %v595
        %v598 = vadd.f32 %v590, %v596
        %v599 = vlaneseq
        %v600 = vshrl.u32 %v599, 7
        %v601 = vsub.s32 7, %v600
        %v602 = vrot.slane %v352, %v601
        %v603 = vmul.f32 %v602, %v473
        %v604 = vmul.f32 %v602, %v478
        %v605 = vadd.f32 %v597, %v603
        %v606 = vadd.f32 %v598, %v604
        %v607 = vmul.f32 %v481, %v482
        %v608 = vmul.f32 %v543, %v544
        %v609 = vadd.f32 %v607, %v608
        %v610 = vmul.f32 %v605, %v606
        %v611 = vadd.f32 %v609, %v610
        %v612 = vmul.f32 %v482, %v482
        %v613 = vmul.f32 %v544, %v544
        %v614 = vadd.f32 %v612, %v613
        %v615 = vmul.f32 %v606, %v606
        %v616 = vadd.f32 %v614, %v615
        %vm617 = vcmp.ge.f32.partialorder %v611, 0.0
        %v618 = vsel %vm617, 1, 0
        %v619 = vcvt.s32.f32 %v618
        %v620 = vsub.f32 1.0, %v619
        %v621 = vadd.f32 %v616, 1e-12
        %v622 = vrcp.pop %v621
        %v623 = vmul.f32 %v611, %v622
        %v624 = vmul.f32 %v620, %v623
        %v625 = vmul.f32 %v481, 0.2
        %v626 = vmul.f32 %v624, %v482
        %v627 = vsub.f32 %v481, %v626
        %v628 = vmul.f32 %v627, 0.8
        %v629 = vadd.f32 %v625, %v628
        %v630 = vmul.f32 %v543, 0.2
        %v631 = vmul.f32 %v624, %v544
        %v632 = vsub.f32 %v543, %v631
        %v633 = vmul.f32 %v632, 0.8
        %v634 = vadd.f32 %v630, %v633
        %v635 = vmul.f32 %v605, 0.2
        %v636 = vmul.f32 %v624, %v606
        %v637 = vsub.f32 %v605, %v636
        %v638 = vmul.f32 %v637, 0.8
        %v639 = vadd.f32 %v635, %v638
        %v640 = vld [vmem:[%s3] sm:$0x3]
        %v641 = vld [vmem:[%s4] sm:$0x3]
        %v642 = vlaneseq
        %v643 = vshrl.u32 %v642, 7
        %v644 = vsub.s32 0, %v643
        %v645 = vrot.slane %v629, %v644
        %647 = vset.pattern.permute.xlu0 0
        %648 = vperm.xlu0 %647, %v640
        %v649 = vpop.permute.xlu0 %648
        %v651 = vmul.f32 %v645, %v649
        %653 = vset.pattern.permute.xlu0 0
        %654 = vperm.xlu0 %653, %v641
        %v655 = vpop.permute.xlu0 %654
        %v657 = vmul.f32 %v645, %v655
        %v658 = vlaneseq
        %v659 = vshrl.u32 %v658, 7
        %v660 = vsub.s32 1, %v659
        %v661 = vrot.slane %v629, %v660
        %662 = vset.pattern.permute.xlu0 1
        %663 = vperm.xlu0 %662, %v640
        %v664 = vpop.permute.xlu0 %663
        %v666 = vmul.f32 %v661, %v664
        %667 = vset.pattern.permute.xlu0 1
        %668 = vperm.xlu0 %667, %v641
        %v669 = vpop.permute.xlu0 %668
        %v671 = vmul.f32 %v661, %v669
        %v672 = vadd.f32 %v651, %v666
        %v673 = vadd.f32 %v657, %v671
        %v674 = vlaneseq
        %v675 = vshrl.u32 %v674, 7
        %v676 = vsub.s32 2, %v675
        %v677 = vrot.slane %v629, %v676
        %678 = vset.pattern.permute.xlu0 2
        %679 = vperm.xlu0 %678, %v640
        %v680 = vpop.permute.xlu0 %679
        %v682 = vmul.f32 %v677, %v680
        %683 = vset.pattern.permute.xlu0 2
        %684 = vperm.xlu0 %683, %v641
        %v685 = vpop.permute.xlu0 %684
        %v687 = vmul.f32 %v677, %v685
        %v688 = vadd.f32 %v672, %v682
        %v689 = vadd.f32 %v673, %v687
        %v690 = vlaneseq
        %v691 = vshrl.u32 %v690, 7
        %v692 = vsub.s32 3, %v691
        %v693 = vrot.slane %v629, %v692
        %694 = vset.pattern.permute.xlu0 3
        %695 = vperm.xlu0 %694, %v640
        %v696 = vpop.permute.xlu0 %695
        %v698 = vmul.f32 %v693, %v696
        %699 = vset.pattern.permute.xlu0 3
        %700 = vperm.xlu0 %699, %v641
        %v701 = vpop.permute.xlu0 %700
        %v703 = vmul.f32 %v693, %v701
        %v704 = vadd.f32 %v688, %v698
        %v705 = vadd.f32 %v689, %v703
        %v706 = vlaneseq
        %v707 = vshrl.u32 %v706, 7
        %v708 = vsub.s32 0, %v707
        %v709 = vrot.slane %v634, %v708
        %v710 = vmul.f32 %v709, %v649
        %v711 = vmul.f32 %v709, %v655
        %v712 = vlaneseq
        %v713 = vshrl.u32 %v712, 7
        %v714 = vsub.s32 1, %v713
        %v715 = vrot.slane %v634, %v714
        %v716 = vmul.f32 %v715, %v664
        %v717 = vmul.f32 %v715, %v669
        %v718 = vadd.f32 %v710, %v716
        %v719 = vadd.f32 %v711, %v717
        %v720 = vlaneseq
        %v721 = vshrl.u32 %v720, 7
        %v722 = vsub.s32 2, %v721
        %v723 = vrot.slane %v634, %v722
        %v724 = vmul.f32 %v723, %v680
        %v725 = vmul.f32 %v723, %v685
        %v726 = vadd.f32 %v718, %v724
        %v727 = vadd.f32 %v719, %v725
        %v728 = vlaneseq
        %v729 = vshrl.u32 %v728, 7
        %v730 = vsub.s32 3, %v729
        %v731 = vrot.slane %v634, %v730
        %v732 = vmul.f32 %v731, %v696
        %v733 = vmul.f32 %v731, %v701
        %v734 = vadd.f32 %v726, %v732
        %v735 = vadd.f32 %v727, %v733
        %v736 = vlaneseq
        %v737 = vshrl.u32 %v736, 7
        %v738 = vsub.s32 0, %v737
        %v739 = vrot.slane %v639, %v738
        %v740 = vmul.f32 %v739, %v649
        %v741 = vmul.f32 %v739, %v655
        %v742 = vlaneseq
        %v743 = vshrl.u32 %v742, 7
        %v744 = vsub.s32 1, %v743
        %v745 = vrot.slane %v639, %v744
        %v746 = vmul.f32 %v745, %v664
        %v747 = vmul.f32 %v745, %v669
        %v748 = vadd.f32 %v740, %v746
        %v749 = vadd.f32 %v741, %v747
        %v750 = vlaneseq
        %v751 = vshrl.u32 %v750, 7
        %v752 = vsub.s32 2, %v751
        %v753 = vrot.slane %v639, %v752
        %v754 = vmul.f32 %v753, %v680
        %v755 = vmul.f32 %v753, %v685
        %v756 = vadd.f32 %v748, %v754
        %v757 = vadd.f32 %v749, %v755
        %v758 = vlaneseq
        %v759 = vshrl.u32 %v758, 7
        %v760 = vsub.s32 3, %v759
        %v761 = vrot.slane %v639, %v760
        %v762 = vmul.f32 %v761, %v696
        %v763 = vmul.f32 %v761, %v701
        %v764 = vadd.f32 %v756, %v762
        %v765 = vadd.f32 %v757, %v763
        %v766 = vmul.f32 %v704, %v705
        %v767 = vmul.f32 %v734, %v735
        %v768 = vadd.f32 %v766, %v767
        %v769 = vmul.f32 %v764, %v765
        %v770 = vadd.f32 %v768, %v769
        %v771 = vmul.f32 %v705, %v705
        %v772 = vmul.f32 %v735, %v735
        %v773 = vadd.f32 %v771, %v772
        %v774 = vmul.f32 %v765, %v765
        %v775 = vadd.f32 %v773, %v774
        %vm776 = vcmp.ge.f32.partialorder %v770, 0.0
        %v777 = vsel %vm776, 1, 0
        %v778 = vcvt.s32.f32 %v777
        %v779 = vsub.f32 1.0, %v778
        %v780 = vadd.f32 %v775, 1e-12
        %v781 = vrcp.pop %v780
        %v782 = vmul.f32 %v770, %v781
        %v783 = vmul.f32 %v779, %v782
        %v784 = vmul.f32 %v704, 0.2
        %v785 = vmul.f32 %v783, %v705
        %v786 = vsub.f32 %v704, %v785
        %v787 = vmul.f32 %v786, 0.8
        %v788 = vadd.f32 %v784, %v787
        %v789 = vmul.f32 %v734, 0.2
        %v790 = vmul.f32 %v783, %v735
        %v791 = vsub.f32 %v734, %v790
        %v792 = vmul.f32 %v791, 0.8
        %v793 = vadd.f32 %v789, %v792
        %v794 = vmul.f32 %v764, 0.2
        %v795 = vmul.f32 %v783, %v765
        %v796 = vsub.f32 %v764, %v795
        %v797 = vmul.f32 %v796, 0.8
        %v798 = vadd.f32 %v794, %v797
        %v799 = vld [vmem:[%s5] sm:$0x3]
        %v800 = vlaneseq
        %v801 = vshrl.u32 %v800, 7
        %v802 = vsub.s32 0, %v801
        %v803 = vrot.slane %v788, %v802
        %805 = vset.pattern.permute.xlu0 0
        %806 = vperm.xlu0 %805, %v799
        %v807 = vpop.permute.xlu0 %806
        %v809 = vmul.f32 %v803, %v807
        %v810 = vlaneseq
        %v811 = vshrl.u32 %v810, 7
        %v812 = vsub.s32 1, %v811
        %v813 = vrot.slane %v788, %v812
        %814 = vset.pattern.permute.xlu0 1
        %815 = vperm.xlu0 %814, %v799
        %v816 = vpop.permute.xlu0 %815
        %v818 = vmul.f32 %v813, %v816
        %v819 = vadd.f32 %v809, %v818
        %v820 = vlaneseq
        %v821 = vshrl.u32 %v820, 7
        %v822 = vsub.s32 0, %v821
        %v823 = vrot.slane %v793, %v822
        %v824 = vmul.f32 %v823, %v807
        %v825 = vlaneseq
        %v826 = vshrl.u32 %v825, 7
        %v827 = vsub.s32 1, %v826
        %v828 = vrot.slane %v793, %v827
        %v829 = vmul.f32 %v828, %v816
        %v830 = vadd.f32 %v824, %v829
        %v831 = vlaneseq
        %v832 = vshrl.u32 %v831, 7
        %v833 = vsub.s32 0, %v832
        %v834 = vrot.slane %v798, %v833
        %v835 = vmul.f32 %v834, %v807
        %v836 = vlaneseq
        %v837 = vshrl.u32 %v836, 7
        %v838 = vsub.s32 1, %v837
        %v839 = vrot.slane %v798, %v838
        %v840 = vmul.f32 %v839, %v816
        %v841 = vadd.f32 %v835, %v840
        %v842 = vmul.f32 %v819, %v819
        %v843 = vmul.f32 %v830, %v830
        %v844 = vadd.f32 %v842, %v843
        %v845 = vmul.f32 %v841, %v841
        %v846 = vadd.f32 %v844, %v845
        %v847 = vrsqrt.pop %v846
        %v848 = vmul.f32 %v846, %v847
        %vm849 = vcmp.eq.f32.partialorder %v846, inf
        %v850 = vsel %vm849, %v846, %v848
        %vm851 = vcmp.eq.f32.partialorder %v846, 0.0
        %v852 = vand.u32 %v846, 2147483648
        %v853 = vsel %vm851, %v852, %v850
        %v854 = vadd.f32 %v853, 1e-12
        %v855 = vrcp.pop %v854
        %v856 = vmul.f32 1.0, %v855
        %v857 = vmul.f32 %v819, %v856
        %v858 = vmul.f32 %v830, %v856
        %v859 = vmul.f32 %v841, %v856
        %v861 = vrot.slane %v857, 7
        %v863 = vmul.f32 %v819, %v861
        %v865 = vrot.slane %v858, 7
        %v867 = vmul.f32 %v830, %v865
        %v868 = vadd.f32 %v863, %v867
        %v870 = vrot.slane %v859, 7
        %v872 = vmul.f32 %v841, %v870
        %v873 = vadd.f32 %v868, %v872
        %v874 = vmul.f32 %v873, %v861
        %v875 = vsub.f32 %v819, %v874
        %v876 = vmul.f32 %v873, %v865
        %v877 = vsub.f32 %v830, %v876
        %v878 = vmul.f32 %v873, %v870
        %v879 = vsub.f32 %v841, %v878
        %v880 = vmul.f32 %v875, %v875
        %v881 = vmul.f32 %v877, %v877
        %v882 = vadd.f32 %v880, %v881
        %v883 = vmul.f32 %v879, %v879
        %v884 = vadd.f32 %v882, %v883
        %v885 = vrsqrt.pop %v884
        %v886 = vmul.f32 %v884, %v885
        %vm887 = vcmp.eq.f32.partialorder %v884, inf
        %v888 = vsel %vm887, %v884, %v886
        %vm889 = vcmp.eq.f32.partialorder %v884, 0.0
        %v890 = vand.u32 %v884, 2147483648
        %v891 = vsel %vm889, %v890, %v888
        %v892 = vadd.f32 %v891, 1e-12
        %v893 = vrcp.pop %v892
        %v894 = vmul.f32 1.0, %v893
        %v895 = vmul.f32 %v875, %v894
        %v896 = vmul.f32 %v877, %v894
        %v897 = vmul.f32 %v879, %v894
        %v899 = vrot.slane %v897, 1
        %v901 = vmul.f32 %v858, %v899
        %v903 = vrot.slane %v896, 1
        %v905 = vmul.f32 %v859, %v903
        %v906 = vsub.f32 %v901, %v905
        %v908 = vrot.slane %v895, 1
        %v910 = vmul.f32 %v859, %v908
        %v911 = vmul.f32 %v857, %v899
        %v912 = vsub.f32 %v910, %v911
        %v913 = vmul.f32 %v857, %v903
        %v914 = vmul.f32 %v858, %v908
        %v915 = vsub.f32 %v913, %v914
        %916 = vst [vmem:[%s347] sm:$0x1] %v857
        %917 = vst [vmem:[%s347] sm:$0x2] %v895
        %918 = vst [vmem:[%s347 + $0x2] sm:$0x1] %v906
        %s919 = scalar_lea.vmem %s347, 4
        %920 = vst [vmem:[%s919] sm:$0x1] %v858
        %921 = vst [vmem:[%s919] sm:$0x2] %v896
        %922 = vst [vmem:[%s919 + $0x2] sm:$0x1] %v912
        %s923 = scalar_lea.vmem %s347, 8
        %924 = vst [vmem:[%s923] sm:$0x1] %v859
        %925 = vst [vmem:[%s923] sm:$0x2] %v897
        %926 = vst [vmem:[%s923 + $0x2] sm:$0x1] %v915
        %v927 = vlaneseq
        %v928 = vshrl.u32 %v927, 7
        %v929 = vsub.s32 0, %v928
        %v930 = vrot.slane %v857, %v929
        %v931 = vmul.f32 %v348, %v930
        %v932 = vlaneseq
        %v933 = vshrl.u32 %v932, 7
        %v934 = vsub.s32 0, %v933
        %v935 = vrot.slane %v858, %v934
        %v936 = vmul.f32 %v350, %v935
        %v937 = vadd.f32 %v931, %v936
        %v938 = vlaneseq
        %v939 = vshrl.u32 %v938, 7
        %v940 = vsub.s32 0, %v939
        %v941 = vrot.slane %v859, %v940
        %v942 = vmul.f32 %v352, %v941
        %v943 = vadd.f32 %v937, %v942
        %944 = vst [vmem:[%s329] sm:$0xff] %v943
        %v945 = vlaneseq
        %v946 = vshrl.u32 %v945, 7
        %v947 = vsub.s32 1, %v946
        %v948 = vrot.slane %v895, %v947
        %v949 = vmul.f32 %v348, %v948
        %v950 = vlaneseq
        %v951 = vshrl.u32 %v950, 7
        %v952 = vsub.s32 1, %v951
        %v953 = vrot.slane %v896, %v952
        %v954 = vmul.f32 %v350, %v953
        %v955 = vadd.f32 %v949, %v954
        %v956 = vlaneseq
        %v957 = vshrl.u32 %v956, 7
        %v958 = vsub.s32 1, %v957
        %v959 = vrot.slane %v897, %v958
        %v960 = vmul.f32 %v352, %v959
        %v961 = vadd.f32 %v955, %v960
        %s962 = scalar_lea.vmem %s329, 8 [#allocation7]
        %963 = vst [vmem:[%s962] sm:$0xff] %v961
        %v964 = vlaneseq
        %v965 = vshrl.u32 %v964, 7
        %v966 = vsub.s32 0, %v965
        %v967 = vrot.slane %v906, %v966
        %v968 = vmul.f32 %v348, %v967
        %v969 = vlaneseq
        %v970 = vshrl.u32 %v969, 7
        %v971 = vsub.s32 0, %v970
        %v972 = vrot.slane %v912, %v971
        %v973 = vmul.f32 %v350, %v972
        %v974 = vadd.f32 %v968, %v973
        %v975 = vlaneseq
        %v976 = vshrl.u32 %v975, 7
        %v977 = vsub.s32 0, %v976
        %v978 = vrot.slane %v915, %v977
        %v979 = vmul.f32 %v352, %v978
        %v980 = vadd.f32 %v974, %v979
        %s981 = scalar_lea.vmem %s329, 16 [#allocation7]
        %982 = vst [vmem:[%s981] sm:$0xff] %v980
        %s983 = sand.u32 %s181, 1
        %s984 = scalar_lea.sflag [#allocation4], %s983
        %s985 = sand.u32 %s181, 1
        %s986 = smul.addr %s985, 24
        %s987 = scalar_lea.vmem [#allocation7], %s986
        %p988 = scmp.lt.s32.totalorder %s30, 1
        %s989 = scalar_select %p988, %s30, 1
        %p990 = scmp.lt.s32.totalorder %s31, 0
        %s991 = scalar_select %p990, %s31, 0
        %s992 = smul.addr %s989, 3
        %s993 = sadd.s32 %s991, %s992
        %s994 = smul.addr %s993, 4
        %s995 = scalar_lea.vmem %s7, %s994
        // Predicated region
        $region53: #{tpu_custom_call.1} parent=43 // pred_check
          %p996 = pneg %p191
        $region54: #{tpu_custom_call.1} parent=43 // pred_check_branch
          %998 = sbr.rel (%p996) target = $region56
        $region55: #{tpu_custom_call.1} parent=43 // pred_region
          %s1000 = ssub.s32 384, 384
          %1001 = vsyncadd %s984, %s1000
          %s1002 = smul.addr %s30, 3
          %s1003 = sadd.s32 %s31, %s1002
          %s1004 = smul.addr %s1003, 128
          %s1005 = scalar_lea.hbm %s6, %s1004
          %s1006 = sshll.u32 %s987, 4
          %s1007 = int_to_ptr.vmem [resolvable:$true] %s1006
          %1012 = dma.vmem_to_hbm [thread:$0]  %s1007, 384, %s1005, %s984, 128, 128, 8
        $region56: #{tpu_custom_call.1} parent=43 // pred_fallthru
          _
        // Predicated region
        $region57: #{tpu_custom_call.1} parent=43 // pred_check
          %p1013 = pneg %p219
        $region58: #{tpu_custom_call.1} parent=43 // pred_check_branch
          %1015 = sbr.rel (%p1013) target = $region60
        $region59: #{tpu_custom_call.1} parent=43 // pred_region
          _
        $region60: #{tpu_custom_call.1} parent=43 // pred_fallthru
          _
      $region44: #{tpu_custom_call.1} parent=5 // pred_fallthru
        _
      %p1016 = scmp.le.s32.totalorder 2, %s21
      // Predicated region
      $region61: #{tpu_custom_call.1} parent=5 // pred_check
        %p1017 = pneg %p1016
      $region62: #{tpu_custom_call.1} parent=5 // pred_check_branch
        %1019 = sbr.rel (%p1017) target = $region64
      $region63: #{tpu_custom_call.1} parent=5 // pred_region
        %s1020 = ssub.s32 %s21, 2
        // Predicated region
        $region65: #{tpu_custom_call.1} parent=63 // pred_check
          %p1021 = pneg %p197
        $region66: #{tpu_custom_call.1} parent=63 // pred_check_branch
          %1023 = sbr.rel (%p1021) target = $region68
        $region67: #{tpu_custom_call.1} parent=63 // pred_region
          %s1024 = sand.u32 %s182, 1
          %s1025 = scalar_lea.sflag [#allocation4], %s1024
          %s1026 = sand.u32 %s182, 1
          %s1027 = smul.addr %s1026, 24
          %s1028 = scalar_lea.vmem [#allocation7], %s1027
          %1029 = dma.done %s1025, 384
        $region68: #{tpu_custom_call.1} parent=63 // pred_fallthru
          _
        // Predicated region
        $region69: #{tpu_custom_call.1} parent=63 // pred_check
          %p1030 = pneg %p225
        $region70: #{tpu_custom_call.1} parent=63 // pred_check_branch
          %1032 = sbr.rel (%p1030) target = $region72
        $region71: #{tpu_custom_call.1} parent=63 // pred_region
          %p1033 = scmp.lt.s32.totalorder %s32, 1
          %s1034 = scalar_select %p1033, %s32, 1
          %p1035 = scmp.lt.s32.totalorder %s33, 0
          %s1036 = scalar_select %p1035, %s33, 0
          %s1037 = smul.addr %s1034, 3
          %s1038 = sadd.s32 %s1036, %s1037
          %s1039 = smul.addr %s1038, 4
          %s1040 = scalar_lea.vmem %s7, %s1039
        $region72: #{tpu_custom_call.1} parent=63 // pred_fallthru
          _
      $region64: #{tpu_custom_call.1} parent=5 // pred_fallthru
        _
    $region6: #{tpu_custom_call.1} parent=1 // loop_footer
      %s25 = sadd.s32 1, %s21
    $region7: #{tpu_custom_call.1} parent=1 // loop_footer_branch
      %20 = sbr.rel target = $region3
    $region8: #{tpu_custom_call.1} parent=1 // loop_exit
      _
    %1041 = vsyncpa [#allocation3], 1
    %s1042 = scalar_lea.sflag [#allocation3], 1
    %1043 = vsyncpa %s1042, 1
    %1044 = vsyncpa [#allocation6], 1
    %1045 = vsyncpa [#allocation4], 1
    %s1046 = scalar_lea.sflag [#allocation4], 1
    %1047 = vsyncpa %s1046, 1

</llo_original>
